<compile_context>
chip_gen: v5e
topology: v5e:2x2
jax: 0.10.0
libtpu: 0.0.40
codegen_flags: <defaults>
</compile_context>

<pallas_src>
import math

import jax
import jax.numpy as jnp
from jax import lax
from jax.experimental import pallas as pl
from jax.experimental.pallas import tpu as pltpu


def _round_up(n, m):
    return ((n + m - 1) // m) * m


def _largest_divisor_leq(n, cap, multiple=1):
    best = None
    for d in range(1, min(n, cap) + 1):
        if n % d == 0 and d % multiple == 0:
            best = d
    if best is None:
        if multiple != 1:
            return _largest_divisor_leq(n, cap, 1)
        best = 1
    return best


def _vmem_capacity_bytes():
    try:
        info = pltpu.get_tpu_info()
        cap = getattr(info, "vmem_capacity_bytes", None)
        if cap:
            return int(cap)
    except Exception:
        pass
    return 64 * 1024 * 1024  # conservative default (v7x per-TensorCore VMEM)


def _pick_t_tile(T, P8, HW8, C3, Coutp, in_bytes, out_bytes, budget):
    """Largest even tT (<=16, <=~T) whose double-buffered working set fits the budget."""
    cap = T if T % 2 == 0 else T + 1
    cap = max(2, min(cap, 16))
    best = 2
    for tt in range(2, cap + 1, 2):
        need = (2 * tt * P8 * C3 * in_bytes        # main T window (double-buffered)
                + 2 * 2 * P8 * C3 * in_bytes       # 2-plane halo window
                + 2 * 9 * C3 * Coutp * in_bytes    # weights (constant block, small)
                + 2 * tt * HW8 * Coutp * out_bytes)  # output tile
        if need <= budget:
            best = tt
    return best


def make_cdc_t_kernel(tT, W8, HW8, C3, Coutp, tM, out_dtype):
    """Pallas kernel body for one (batch, T-tile) grid step."""
    nM = HW8 // tM

    def kernel(xm_ref, xh_ref, w_ref, o_ref):
        # xm_ref: (1, tT, P8, C3)  main window: padded-T planes [t*tT, t*tT+tT)
        # xh_ref: (1, 2,  P8, C3)  halo window: padded-T planes [t*tT+tT, t*tT+tT+2)
        # w_ref : (9, C3, Coutp)   per-(kt,kh) weights, kw folded into C3; centre tap
        #                          already carries -theta*kernel_diff
        # o_ref : (1, tT, HW8, Coutp)

        def compute_plane(lt_out, load_tap):
            # One output plane, M-tiled so the f32 accumulator stays in vregs.
            for m in range(nM):
                m0 = m * tM                              # static, multiple of 8
                acc = jnp.zeros((tM, Coutp), jnp.float32)
                for kt in range(3):
                    for kh in range(3):
                        lhs = load_tap(kt, kh * W8 + m0)  # (tM, C3), aligned slice
                        acc = acc + jnp.dot(
                            lhs, w_ref[kt * 3 + kh],
                            preferred_element_type=jnp.float32)
                o_ref[0, lt_out, pl.ds(m0, tM), :] = acc.astype(out_dtype)

        # Interior planes: all three temporal taps live inside the main window.
        if tT > 2:
            def body(lt, carry):
                compute_plane(
                    lt, lambda kt, off: xm_ref[0, lt + kt, pl.ds(off, tM), :])
                return carry
            lax.fori_loop(0, tT - 2, body, 0)

        # Plane tT-2: taps 0,1 from the main window, tap 2 from halo plane 0.
        compute_plane(
            tT - 2,
            lambda kt, off: (xm_ref[0, tT - 2 + kt, pl.ds(off, tM), :]
                             if kt < 2 else xh_ref[0, 0, pl.ds(off, tM), :]))
        # Plane tT-1: tap 0 from the main window, taps 1,2 from halo planes 0,1.
        compute_plane(
            tT - 1,
            lambda kt, off: (xm_ref[0, tT - 1, pl.ds(off, tM), :]
                             if kt == 0 else xh_ref[0, kt - 1, pl.ds(off, tM), :]))

    return kernel


def cdc_t_forward(x_ncdhw, weight, theta=0.6, compute_dtype=jnp.bfloat16):
    """CDC_T forward.

    x_ncdhw : (N, C_in, T, H, W)    (PyTorch NCDHW convention)
    weight  : (C_out, C_in, 3, 3, 3)
    theta   : Python float (as in the module; not traced)
    returns : (N, C_out, T, H, W)
    """
    N, Cin, T, H, W = x_ncdhw.shape
    Cout = weight.shape[0]
    assert weight.shape == (Cout, Cin, 3, 3, 3)

    out_dtype = x_ncdhw.dtype
    in_bytes = jnp.dtype(compute_dtype).itemsize
    out_bytes = jnp.dtype(out_dtype).itemsize

    C3 = 3 * Cin
    Coutp = _round_up(Cout, 128)          # lane-dense output channels
    W8 = _round_up(W, 8)                  # sublane-aligned row stride
    HW8 = H * W8                          # output-plane rows (incl. junk w >= W)
    P8 = (H + 2) * W8                     # flattened padded-plane rows

    vmem_cap = _vmem_capacity_bytes()
    vmem_limit = max(32 << 20, min(int(vmem_cap * 0.75), 100 << 20))
    tT = _pick_t_tile(T, P8, HW8, C3, Coutp, in_bytes, out_bytes,
                      int(vmem_limit * 0.7))
    Tp = _round_up(T, tT)
    Tt = Tp // tT

    # M-tile: keep the f32 accumulator <= ~128 KiB (<= ~32 vregs at Coutp=128).
    tM_cap = max(8, (128 * 1024) // (Coutp * 4))
    tM = _largest_divisor_leq(HW8, tM_cap, multiple=8)

    # ---- host-side layout prep ----
    x = jnp.transpose(x_ncdhw, (0, 2, 3, 4, 1))                      # (N,T,H,W,Cin)
    xp = jnp.pad(x, ((0, 0), (1, 1 + Tp - T), (1, 1), (1, 1), (0, 0)))
    # fold kw into channels: channel index = kw*Cin + ci
    x3 = jnp.concatenate(
        [xp[..., 0:W, :], xp[..., 1:W + 1, :], xp[..., 2:W + 2, :]], axis=-1)
    if W8 != W:
        x3 = jnp.pad(x3, ((0, 0), (0, 0), (0, 0), (0, W8 - W), (0, 0)))
    x3 = x3.reshape(N, Tp + 2, P8, C3).astype(compute_dtype)         # (N,Tp+2,P8,C3)

    # ---- weights: (Cout,Cin,3,3,3) -> (kt,kh, kw*Cin, Cout), fold theta term ----
    wk = jnp.transpose(weight, (2, 3, 4, 1, 0)).astype(jnp.float32)  # (3,3,3,Cin,Cout)
    if math.fabs(theta) >= 1e-8:
        kd = (weight[:, :, 0, :, :].sum(axis=(2, 3))
              + weight[:, :, 2, :, :].sum(axis=(2, 3))).astype(jnp.float32)
        wk = wk.at[1, 1, 1].add(-theta * kd.T)
    wm = wk.reshape(9, C3, Cout)
    if Coutp != Cout:
        wm = jnp.pad(wm, ((0, 0), (0, 0), (0, Coutp - Cout)))
    wm = wm.astype(compute_dtype)

    kernel = make_cdc_t_kernel(tT, W8, HW8, C3, Coutp, tM, out_dtype)

    flops = 2 * N * Tp * 9 * HW8 * C3 * Coutp
    bytes_accessed = (N * Tt * (tT + 2) * P8 * C3 * in_bytes
                      + N * Tp * HW8 * Coutp * out_bytes
                      + 9 * C3 * Coutp * in_bytes)

    out = pl.pallas_call(
        kernel,
        out_shape=jax.ShapeDtypeStruct((N, Tp, HW8, Coutp), out_dtype),
        grid_spec=pltpu.PrefetchScalarGridSpec(
            num_scalar_prefetch=0,
            grid=(N, Tt),
            in_specs=[
                # main window: padded-T planes [t*tT, t*tT+tT)
                pl.BlockSpec((1, tT, P8, C3), lambda n, t: (n, t, 0, 0)),
                # halo window: padded-T planes [(t+1)*tT, (t+1)*tT+2)  (tT is even)
                pl.BlockSpec((1, 2, P8, C3),
                             lambda n, t: (n, (t + 1) * (tT // 2), 0, 0)),
                # weights: constant block (small; double-buffering cost negligible)
                pl.BlockSpec((9, C3, Coutp), lambda n, t: (0, 0, 0)),
            ],
            out_specs=pl.BlockSpec((1, tT, HW8, Coutp), lambda n, t: (n, t, 0, 0)),
        ),
        compiler_params=pltpu.CompilerParams(
            dimension_semantics=("parallel", "parallel"),
            vmem_limit_bytes=vmem_limit,
        ),
        cost_estimate=pl.CostEstimate(flops=flops, transcendentals=0,
                                      bytes_accessed=bytes_accessed),
    )(x3, x3, wm)   # same array passed twice -> two auto-pipelined windows, no copy

    out = out[:, :T, :, :Cout].reshape(N, T, H, W8, Cout)[:, :, :, :W, :]
    # TODO(synk): skip this transpose when the downstream op accepts channels-last.
    return jnp.transpose(out, (0, 4, 1, 2, 3))


def cdc_t_reference(x_ncdhw, weight, theta=0.6):
    """Pure-JAX reference mirroring the PyTorch module."""
    out_normal = lax.conv_general_dilated(
        x_ncdhw, weight,
        window_strides=(1, 1, 1),
        padding=((1, 1), (1, 1), (1, 1)),
        dimension_numbers=("NCDHW", "OIDHW", "NCDHW"),
    )
    if math.fabs(theta - 0.0) < 1e-8:
        return out_normal
    kd = weight[:, :, 0, :, :].sum(axis=(2, 3)) + weight[:, :, 2, :, :].sum(axis=(2, 3))
    out_diff = jnp.einsum("oi,nithw->nothw", kd, x_ncdhw)
    return out_normal - theta * out_diff


if __name__ == "__main__":
    # Small deterministic problem: x of shape (N, C_in, T, H, W)
    N, Cin, Cout, T, H, W = 2, 4, 8, 8, 8, 8
    theta = 0.6

    key = jax.random.PRNGKey(0)
    kx, kw_key = jax.random.split(key)

    x = jax.random.normal(kx, (N, Cin, T, H, W), dtype=jnp.float32)

    # Deterministic Conv3d-style init: uniform(-b, b), b = 1/sqrt(fan_in)
    fan_in = Cin * 3 * 3 * 3
    bound = 1.0 / math.sqrt(fan_in)
    weight = jax.random.uniform(
        kw_key, (Cout, Cin, 3, 3, 3), dtype=jnp.float32, minval=-bound, maxval=bound
    )

    fwd = jax.jit(cdc_t_forward, static_argnames=("theta", "compute_dtype"))

    ref = jax.block_until_ready(cdc_t_reference(x, weight, theta=theta))

    # bf16 compute path (default): fast path, loose tolerance
    out_bf16 = jax.block_until_ready(fwd(x, weight, theta=theta))
    assert out_bf16.shape == (N, Cout, T, H, W), out_bf16.shape
    err_bf16 = float(jnp.max(jnp.abs(out_bf16.astype(jnp.float32) - ref)))
    assert err_bf16 < 3e-2, f"bf16 path max abs error too large: {err_bf16}"

    # f32 compute path: strict check of the layout / indexing
    out_f32 = jax.block_until_ready(
        fwd(x, weight, theta=theta, compute_dtype=jnp.float32))
    err_f32 = float(jnp.max(jnp.abs(out_f32 - ref)))
    assert err_f32 < 1e-3, f"f32 path max abs error too large: {err_f32}"

    # theta == 0 path (central-difference term disabled; zero in-kernel cost)
    out0 = jax.block_until_ready(fwd(x, weight, theta=0.0))
    ref0 = jax.block_until_ready(cdc_t_reference(x, weight, theta=0.0))
    err0 = float(jnp.max(jnp.abs(out0.astype(jnp.float32) - ref0)))
    assert err0 < 3e-2, f"theta=0 max abs error too large: {err0}"

    print("KERNEL_OK")
</pallas_src>

<mosaic_0001>
module attributes {stable_mosaic.version = 11 : i64} {
  func.func @kernel(%arg0: i32, %arg1: i32, %arg2: memref<1x8x80x12xbf16, #tpu.memory_space<vmem>>, %arg3: memref<1x2x80x12xbf16, #tpu.memory_space<vmem>>, %arg4: memref<9x12x128xbf16, #tpu.memory_space<vmem>>, %arg5: memref<1x8x64x128xf32, #tpu.memory_space<vmem>>) attributes {dimension_semantics = [#tpu.dimension_semantics<parallel>, #tpu.dimension_semantics<parallel>], iteration_bounds = array<i64: 2, 1>, scalar_prefetch = 0 : i64, scratch_operands = 0 : i64, tpu.core_type = #tpu.core_type<tc>, window_params = [{transform_indices = @transform_0, window_bounds = array<i64: 1, 8, 80, 12>}, {transform_indices = @transform_1, window_bounds = array<i64: 1, 2, 80, 12>}, {pipeline_mode = #tpu.pipeline_mode<synchronous>, transform_indices = @transform_2, window_bounds = array<i64: 9, 12, 128>}, {transform_indices = @transform_3, window_bounds = array<i64: 1, 8, 64, 128>}]} {
    %c0_i32 = arith.constant 0 : i32
    %c6_i32 = arith.constant 6 : i32
    %0 = arith.addi %c0_i32, %c6_i32 : i32
    %c1_i32 = arith.constant 1 : i32
    scf.for %arg6 = %c0_i32 to %0 step %c1_i32  : i32 {
      %cst_144 = arith.constant 0.000000e+00 : f32
      %117 = vector.broadcast %cst_144 : f32 to vector<64x128xf32>
      %c0_i32_145 = arith.constant 0 : i32
      %118 = arith.addi %arg6, %c0_i32_145 : i32
      %c0_146 = arith.constant 0 : index
      %119 = arith.index_cast %118 : i32 to index
      %c0_147 = arith.constant 0 : index
      %c0_148 = arith.constant 0 : index
      %120 = vector.load %arg2[%c0_146, %119, %c0_147, %c0_148] : memref<1x8x80x12xbf16, #tpu.memory_space<vmem>>, vector<1x1x64x12xbf16>
      %121 = vector.shape_cast %120 : vector<1x1x64x12xbf16> to vector<64x12xbf16>
      %c0_149 = arith.constant 0 : index
      %c0_150 = arith.constant 0 : index
      %c0_151 = arith.constant 0 : index
      %122 = vector.load %arg4[%c0_149, %c0_150, %c0_151] : memref<9x12x128xbf16, #tpu.memory_space<vmem>>, vector<1x12x128xbf16>
      %123 = vector.shape_cast %122 : vector<1x12x128xbf16> to vector<12x128xbf16>
      %cst_152 = arith.constant dense<0.000000e+00> : vector<64x128xf32>
      %124 = tpu.matmul %121, %123, %cst_152 {dimension_numbers = #tpu.dot_dimension_numbers<[1], [0], [0], [1], [0, 0, 1, 1], [], []>} : vector<64x12xbf16>, vector<12x128xbf16>, vector<64x128xf32> -> vector<64x128xf32>
      %125 = arith.addf %117, %124 : vector<64x128xf32>
      %c0_i32_153 = arith.constant 0 : i32
      %126 = arith.addi %arg6, %c0_i32_153 : i32
      %c0_154 = arith.constant 0 : index
      %127 = arith.index_cast %126 : i32 to index
      %c8_155 = arith.constant 8 : index
      %c0_156 = arith.constant 0 : index
      %128 = vector.load %arg2[%c0_154, %127, %c8_155, %c0_156] : memref<1x8x80x12xbf16, #tpu.memory_space<vmem>>, vector<1x1x64x12xbf16>
      %129 = vector.shape_cast %128 : vector<1x1x64x12xbf16> to vector<64x12xbf16>
      %c1_157 = arith.constant 1 : index
      %c0_158 = arith.constant 0 : index
      %c0_159 = arith.constant 0 : index
      %130 = vector.load %arg4[%c1_157, %c0_158, %c0_159] : memref<9x12x128xbf16, #tpu.memory_space<vmem>>, vector<1x12x128xbf16>
      %131 = vector.shape_cast %130 : vector<1x12x128xbf16> to vector<12x128xbf16>
      %cst_160 = arith.constant dense<0.000000e+00> : vector<64x128xf32>
      %132 = tpu.matmul %129, %131, %cst_160 {dimension_numbers = #tpu.dot_dimension_numbers<[1], [0], [0], [1], [0, 0, 1, 1], [], []>} : vector<64x12xbf16>, vector<12x128xbf16>, vector<64x128xf32> -> vector<64x128xf32>
      %133 = arith.addf %125, %132 : vector<64x128xf32>
      %c0_i32_161 = arith.constant 0 : i32
      %134 = arith.addi %arg6, %c0_i32_161 : i32
      %c0_162 = arith.constant 0 : index
      %135 = arith.index_cast %134 : i32 to index
      %c16_163 = arith.constant 16 : index
      %c0_164 = arith.constant 0 : index
      %136 = vector.load %arg2[%c0_162, %135, %c16_163, %c0_164] : memref<1x8x80x12xbf16, #tpu.memory_space<vmem>>, vector<1x1x64x12xbf16>
      %137 = vector.shape_cast %136 : vector<1x1x64x12xbf16> to vector<64x12xbf16>
      %c2_165 = arith.constant 2 : index
      %c0_166 = arith.constant 0 : index
      %c0_167 = arith.constant 0 : index
      %138 = vector.load %arg4[%c2_165, %c0_166, %c0_167] : memref<9x12x128xbf16, #tpu.memory_space<vmem>>, vector<1x12x128xbf16>
      %139 = vector.shape_cast %138 : vector<1x12x128xbf16> to vector<12x128xbf16>
      %cst_168 = arith.constant dense<0.000000e+00> : vector<64x128xf32>
      %140 = tpu.matmul %137, %139, %cst_168 {dimension_numbers = #tpu.dot_dimension_numbers<[1], [0], [0], [1], [0, 0, 1, 1], [], []>} : vector<64x12xbf16>, vector<12x128xbf16>, vector<64x128xf32> -> vector<64x128xf32>
      %141 = arith.addf %133, %140 : vector<64x128xf32>
      %c1_i32_169 = arith.constant 1 : i32
      %142 = arith.addi %arg6, %c1_i32_169 : i32
      %c0_170 = arith.constant 0 : index
      %143 = arith.index_cast %142 : i32 to index
      %c0_171 = arith.constant 0 : index
      %c0_172 = arith.constant 0 : index
      %144 = vector.load %arg2[%c0_170, %143, %c0_171, %c0_172] : memref<1x8x80x12xbf16, #tpu.memory_space<vmem>>, vector<1x1x64x12xbf16>
      %145 = vector.shape_cast %144 : vector<1x1x64x12xbf16> to vector<64x12xbf16>
      %c3_173 = arith.constant 3 : index
      %c0_174 = arith.constant 0 : index
      %c0_175 = arith.constant 0 : index
      %146 = vector.load %arg4[%c3_173, %c0_174, %c0_175] : memref<9x12x128xbf16, #tpu.memory_space<vmem>>, vector<1x12x128xbf16>
      %147 = vector.shape_cast %146 : vector<1x12x128xbf16> to vector<12x128xbf16>
      %cst_176 = arith.constant dense<0.000000e+00> : vector<64x128xf32>
      %148 = tpu.matmul %145, %147, %cst_176 {dimension_numbers = #tpu.dot_dimension_numbers<[1], [0], [0], [1], [0, 0, 1, 1], [], []>} : vector<64x12xbf16>, vector<12x128xbf16>, vector<64x128xf32> -> vector<64x128xf32>
      %149 = arith.addf %141, %148 : vector<64x128xf32>
      %c1_i32_177 = arith.constant 1 : i32
      %150 = arith.addi %arg6, %c1_i32_177 : i32
      %c0_178 = arith.constant 0 : index
      %151 = arith.index_cast %150 : i32 to index
      %c8_179 = arith.constant 8 : index
      %c0_180 = arith.constant 0 : index
      %152 = vector.load %arg2[%c0_178, %151, %c8_179, %c0_180] : memref<1x8x80x12xbf16, #tpu.memory_space<vmem>>, vector<1x1x64x12xbf16>
      %153 = vector.shape_cast %152 : vector<1x1x64x12xbf16> to vector<64x12xbf16>
      %c4_181 = arith.constant 4 : index
      %c0_182 = arith.constant 0 : index
      %c0_183 = arith.constant 0 : index
      %154 = vector.load %arg4[%c4_181, %c0_182, %c0_183] : memref<9x12x128xbf16, #tpu.memory_space<vmem>>, vector<1x12x128xbf16>
      %155 = vector.shape_cast %154 : vector<1x12x128xbf16> to vector<12x128xbf16>
      %cst_184 = arith.constant dense<0.000000e+00> : vector<64x128xf32>
      %156 = tpu.matmul %153, %155, %cst_184 {dimension_numbers = #tpu.dot_dimension_numbers<[1], [0], [0], [1], [0, 0, 1, 1], [], []>} : vector<64x12xbf16>, vector<12x128xbf16>, vector<64x128xf32> -> vector<64x128xf32>
      %157 = arith.addf %149, %156 : vector<64x128xf32>
      %c1_i32_185 = arith.constant 1 : i32
      %158 = arith.addi %arg6, %c1_i32_185 : i32
      %c0_186 = arith.constant 0 : index
      %159 = arith.index_cast %158 : i32 to index
      %c16_187 = arith.constant 16 : index
      %c0_188 = arith.constant 0 : index
      %160 = vector.load %arg2[%c0_186, %159, %c16_187, %c0_188] : memref<1x8x80x12xbf16, #tpu.memory_space<vmem>>, vector<1x1x64x12xbf16>
      %161 = vector.shape_cast %160 : vector<1x1x64x12xbf16> to vector<64x12xbf16>
      %c5_189 = arith.constant 5 : index
      %c0_190 = arith.constant 0 : index
      %c0_191 = arith.constant 0 : index
      %162 = vector.load %arg4[%c5_189, %c0_190, %c0_191] : memref<9x12x128xbf16, #tpu.memory_space<vmem>>, vector<1x12x128xbf16>
      %163 = vector.shape_cast %162 : vector<1x12x128xbf16> to vector<12x128xbf16>
      %cst_192 = arith.constant dense<0.000000e+00> : vector<64x128xf32>
      %164 = tpu.matmul %161, %163, %cst_192 {dimension_numbers = #tpu.dot_dimension_numbers<[1], [0], [0], [1], [0, 0, 1, 1], [], []>} : vector<64x12xbf16>, vector<12x128xbf16>, vector<64x128xf32> -> vector<64x128xf32>
      %165 = arith.addf %157, %164 : vector<64x128xf32>
      %c2_i32 = arith.constant 2 : i32
      %166 = arith.addi %arg6, %c2_i32 : i32
      %c0_193 = arith.constant 0 : index
      %167 = arith.index_cast %166 : i32 to index
      %c0_194 = arith.constant 0 : index
      %c0_195 = arith.constant 0 : index
      %168 = vector.load %arg2[%c0_193, %167, %c0_194, %c0_195] : memref<1x8x80x12xbf16, #tpu.memory_space<vmem>>, vector<1x1x64x12xbf16>
      %169 = vector.shape_cast %168 : vector<1x1x64x12xbf16> to vector<64x12xbf16>
      %c6_196 = arith.constant 6 : index
      %c0_197 = arith.constant 0 : index
      %c0_198 = arith.constant 0 : index
      %170 = vector.load %arg4[%c6_196, %c0_197, %c0_198] : memref<9x12x128xbf16, #tpu.memory_space<vmem>>, vector<1x12x128xbf16>
      %171 = vector.shape_cast %170 : vector<1x12x128xbf16> to vector<12x128xbf16>
      %cst_199 = arith.constant dense<0.000000e+00> : vector<64x128xf32>
      %172 = tpu.matmul %169, %171, %cst_199 {dimension_numbers = #tpu.dot_dimension_numbers<[1], [0], [0], [1], [0, 0, 1, 1], [], []>} : vector<64x12xbf16>, vector<12x128xbf16>, vector<64x128xf32> -> vector<64x128xf32>
      %173 = arith.addf %165, %172 : vector<64x128xf32>
      %c2_i32_200 = arith.constant 2 : i32
      %174 = arith.addi %arg6, %c2_i32_200 : i32
      %c0_201 = arith.constant 0 : index
      %175 = arith.index_cast %174 : i32 to index
      %c8_202 = arith.constant 8 : index
      %c0_203 = arith.constant 0 : index
      %176 = vector.load %arg2[%c0_201, %175, %c8_202, %c0_203] : memref<1x8x80x12xbf16, #tpu.memory_space<vmem>>, vector<1x1x64x12xbf16>
      %177 = vector.shape_cast %176 : vector<1x1x64x12xbf16> to vector<64x12xbf16>
      %c7_204 = arith.constant 7 : index
      %c0_205 = arith.constant 0 : index
      %c0_206 = arith.constant 0 : index
      %178 = vector.load %arg4[%c7_204, %c0_205, %c0_206] : memref<9x12x128xbf16, #tpu.memory_space<vmem>>, vector<1x12x128xbf16>
      %179 = vector.shape_cast %178 : vector<1x12x128xbf16> to vector<12x128xbf16>
      %cst_207 = arith.constant dense<0.000000e+00> : vector<64x128xf32>
      %180 = tpu.matmul %177, %179, %cst_207 {dimension_numbers = #tpu.dot_dimension_numbers<[1], [0], [0], [1], [0, 0, 1, 1], [], []>} : vector<64x12xbf16>, vector<12x128xbf16>, vector<64x128xf32> -> vector<64x128xf32>
      %181 = arith.addf %173, %180 : vector<64x128xf32>
      %c2_i32_208 = arith.constant 2 : i32
      %182 = arith.addi %arg6, %c2_i32_208 : i32
      %c0_209 = arith.constant 0 : index
      %183 = arith.index_cast %182 : i32 to index
      %c16_210 = arith.constant 16 : index
      %c0_211 = arith.constant 0 : index
      %184 = vector.load %arg2[%c0_209, %183, %c16_210, %c0_211] : memref<1x8x80x12xbf16, #tpu.memory_space<vmem>>, vector<1x1x64x12xbf16>
      %185 = vector.shape_cast %184 : vector<1x1x64x12xbf16> to vector<64x12xbf16>
      %c8_212 = arith.constant 8 : index
      %c0_213 = arith.constant 0 : index
      %c0_214 = arith.constant 0 : index
      %186 = vector.load %arg4[%c8_212, %c0_213, %c0_214] : memref<9x12x128xbf16, #tpu.memory_space<vmem>>, vector<1x12x128xbf16>
      %187 = vector.shape_cast %186 : vector<1x12x128xbf16> to vector<12x128xbf16>
      %cst_215 = arith.constant dense<0.000000e+00> : vector<64x128xf32>
      %188 = tpu.matmul %185, %187, %cst_215 {dimension_numbers = #tpu.dot_dimension_numbers<[1], [0], [0], [1], [0, 0, 1, 1], [], []>} : vector<64x12xbf16>, vector<12x128xbf16>, vector<64x128xf32> -> vector<64x128xf32>
      %189 = arith.addf %181, %188 : vector<64x128xf32>
      %c0_216 = arith.constant 0 : index
      %190 = arith.index_cast %arg6 : i32 to index
      %c0_217 = arith.constant 0 : index
      %c0_218 = arith.constant 0 : index
      %191 = vector.load %arg5[%c0_216, %190, %c0_217, %c0_218] : memref<1x8x64x128xf32, #tpu.memory_space<vmem>>, vector<1x1x64x128xf32>
      %192 = vector.shape_cast %191 : vector<1x1x64x128xf32> to vector<64x128xf32>
      %193 = vector.shape_cast %189 : vector<64x128xf32> to vector<1x1x64x128xf32>
      tpu.vector_store %arg5[%c0_216, %190, %c0_217, %c0_218], %193 {strides = array<i32>} : memref<1x8x64x128xf32, #tpu.memory_space<vmem>>, vector<1x1x64x128xf32>,
    }
    %c6_i32_0 = arith.constant 6 : i32
    %cst = arith.constant 0.000000e+00 : f32
    %1 = vector.broadcast %cst : f32 to vector<64x128xf32>
    %c0 = arith.constant 0 : index
    %c6 = arith.constant 6 : index
    %c0_1 = arith.constant 0 : index
    %c0_2 = arith.constant 0 : index
    %2 = vector.load %arg2[%c0, %c6, %c0_1, %c0_2] : memref<1x8x80x12xbf16, #tpu.memory_space<vmem>>, vector<1x1x64x12xbf16>
    %3 = vector.shape_cast %2 : vector<1x1x64x12xbf16> to vector<64x12xbf16>
    %c0_3 = arith.constant 0 : index
    %c0_4 = arith.constant 0 : index
    %c0_5 = arith.constant 0 : index
    %4 = vector.load %arg4[%c0_3, %c0_4, %c0_5] : memref<9x12x128xbf16, #tpu.memory_space<vmem>>, vector<1x12x128xbf16>
    %5 = vector.shape_cast %4 : vector<1x12x128xbf16> to vector<12x128xbf16>
    %cst_6 = arith.constant dense<0.000000e+00> : vector<64x128xf32>
    %6 = tpu.matmul %3, %5, %cst_6 {dimension_numbers = #tpu.dot_dimension_numbers<[1], [0], [0], [1], [0, 0, 1, 1], [], []>} : vector<64x12xbf16>, vector<12x128xbf16>, vector<64x128xf32> -> vector<64x128xf32>
    %7 = arith.addf %1, %6 : vector<64x128xf32>
    %c0_7 = arith.constant 0 : index
    %c6_8 = arith.constant 6 : index
    %c8 = arith.constant 8 : index
    %c0_9 = arith.constant 0 : index
    %8 = vector.load %arg2[%c0_7, %c6_8, %c8, %c0_9] : memref<1x8x80x12xbf16, #tpu.memory_space<vmem>>, vector<1x1x64x12xbf16>
    %9 = vector.shape_cast %8 : vector<1x1x64x12xbf16> to vector<64x12xbf16>
    %c1 = arith.constant 1 : index
    %c0_10 = arith.constant 0 : index
    %c0_11 = arith.constant 0 : index
    %10 = vector.load %arg4[%c1, %c0_10, %c0_11] : memref<9x12x128xbf16, #tpu.memory_space<vmem>>, vector<1x12x128xbf16>
    %11 = vector.shape_cast %10 : vector<1x12x128xbf16> to vector<12x128xbf16>
    %cst_12 = arith.constant dense<0.000000e+00> : vector<64x128xf32>
    %12 = tpu.matmul %9, %11, %cst_12 {dimension_numbers = #tpu.dot_dimension_numbers<[1], [0], [0], [1], [0, 0, 1, 1], [], []>} : vector<64x12xbf16>, vector<12x128xbf16>, vector<64x128xf32> -> vector<64x128xf32>
    %13 = arith.addf %7, %12 : vector<64x128xf32>
    %c0_13 = arith.constant 0 : index
    %c6_14 = arith.constant 6 : index
    %c16 = arith.constant 16 : index
    %c0_15 = arith.constant 0 : index
    %14 = vector.load %arg2[%c0_13, %c6_14, %c16, %c0_15] : memref<1x8x80x12xbf16, #tpu.memory_space<vmem>>, vector<1x1x64x12xbf16>
    %15 = vector.shape_cast %14 : vector<1x1x64x12xbf16> to vector<64x12xbf16>
    %c2 = arith.constant 2 : index
    %c0_16 = arith.constant 0 : index
    %c0_17 = arith.constant 0 : index
    %16 = vector.load %arg4[%c2, %c0_16, %c0_17] : memref<9x12x128xbf16, #tpu.memory_space<vmem>>, vector<1x12x128xbf16>
    %17 = vector.shape_cast %16 : vector<1x12x128xbf16> to vector<12x128xbf16>
    %cst_18 = arith.constant dense<0.000000e+00> : vector<64x128xf32>
    %18 = tpu.matmul %15, %17, %cst_18 {dimension_numbers = #tpu.dot_dimension_numbers<[1], [0], [0], [1], [0, 0, 1, 1], [], []>} : vector<64x12xbf16>, vector<12x128xbf16>, vector<64x128xf32> -> vector<64x128xf32>
    %19 = arith.addf %13, %18 : vector<64x128xf32>
    %c0_19 = arith.constant 0 : index
    %c7 = arith.constant 7 : index
    %c0_20 = arith.constant 0 : index
    %c0_21 = arith.constant 0 : index
    %20 = vector.load %arg2[%c0_19, %c7, %c0_20, %c0_21] : memref<1x8x80x12xbf16, #tpu.memory_space<vmem>>, vector<1x1x64x12xbf16>
    %21 = vector.shape_cast %20 : vector<1x1x64x12xbf16> to vector<64x12xbf16>
    %c3 = arith.constant 3 : index
    %c0_22 = arith.constant 0 : index
    %c0_23 = arith.constant 0 : index
    %22 = vector.load %arg4[%c3, %c0_22, %c0_23] : memref<9x12x128xbf16, #tpu.memory_space<vmem>>, vector<1x12x128xbf16>
    %23 = vector.shape_cast %22 : vector<1x12x128xbf16> to vector<12x128xbf16>
    %cst_24 = arith.constant dense<0.000000e+00> : vector<64x128xf32>
    %24 = tpu.matmul %21, %23, %cst_24 {dimension_numbers = #tpu.dot_dimension_numbers<[1], [0], [0], [1], [0, 0, 1, 1], [], []>} : vector<64x12xbf16>, vector<12x128xbf16>, vector<64x128xf32> -> vector<64x128xf32>
    %25 = arith.addf %19, %24 : vector<64x128xf32>
    %c0_25 = arith.constant 0 : index
    %c7_26 = arith.constant 7 : index
    %c8_27 = arith.constant 8 : index
    %c0_28 = arith.constant 0 : index
    %26 = vector.load %arg2[%c0_25, %c7_26, %c8_27, %c0_28] : memref<1x8x80x12xbf16, #tpu.memory_space<vmem>>, vector<1x1x64x12xbf16>
    %27 = vector.shape_cast %26 : vector<1x1x64x12xbf16> to vector<64x12xbf16>
    %c4 = arith.constant 4 : index
    %c0_29 = arith.constant 0 : index
    %c0_30 = arith.constant 0 : index
    %28 = vector.load %arg4[%c4, %c0_29, %c0_30] : memref<9x12x128xbf16, #tpu.memory_space<vmem>>, vector<1x12x128xbf16>
    %29 = vector.shape_cast %28 : vector<1x12x128xbf16> to vector<12x128xbf16>
    %cst_31 = arith.constant dense<0.000000e+00> : vector<64x128xf32>
    %30 = tpu.matmul %27, %29, %cst_31 {dimension_numbers = #tpu.dot_dimension_numbers<[1], [0], [0], [1], [0, 0, 1, 1], [], []>} : vector<64x12xbf16>, vector<12x128xbf16>, vector<64x128xf32> -> vector<64x128xf32>
    %31 = arith.addf %25, %30 : vector<64x128xf32>
    %c0_32 = arith.constant 0 : index
    %c7_33 = arith.constant 7 : index
    %c16_34 = arith.constant 16 : index
    %c0_35 = arith.constant 0 : index
    %32 = vector.load %arg2[%c0_32, %c7_33, %c16_34, %c0_35] : memref<1x8x80x12xbf16, #tpu.memory_space<vmem>>, vector<1x1x64x12xbf16>
    %33 = vector.shape_cast %32 : vector<1x1x64x12xbf16> to vector<64x12xbf16>
    %c5 = arith.constant 5 : index
    %c0_36 = arith.constant 0 : index
    %c0_37 = arith.constant 0 : index
    %34 = vector.load %arg4[%c5, %c0_36, %c0_37] : memref<9x12x128xbf16, #tpu.memory_space<vmem>>, vector<1x12x128xbf16>
    %35 = vector.shape_cast %34 : vector<1x12x128xbf16> to vector<12x128xbf16>
    %cst_38 = arith.constant dense<0.000000e+00> : vector<64x128xf32>
    %36 = tpu.matmul %33, %35, %cst_38 {dimension_numbers = #tpu.dot_dimension_numbers<[1], [0], [0], [1], [0, 0, 1, 1], [], []>} : vector<64x12xbf16>, vector<12x128xbf16>, vector<64x128xf32> -> vector<64x128xf32>
    %37 = arith.addf %31, %36 : vector<64x128xf32>
    %c0_39 = arith.constant 0 : index
    %c0_40 = arith.constant 0 : index
    %c0_41 = arith.constant 0 : index
    %c0_42 = arith.constant 0 : index
    %38 = vector.load %arg3[%c0_39, %c0_40, %c0_41, %c0_42] : memref<1x2x80x12xbf16, #tpu.memory_space<vmem>>, vector<1x1x64x12xbf16>
    %39 = vector.shape_cast %38 : vector<1x1x64x12xbf16> to vector<64x12xbf16>
    %c6_43 = arith.constant 6 : index
    %c0_44 = arith.constant 0 : index
    %c0_45 = arith.constant 0 : index
    %40 = vector.load %arg4[%c6_43, %c0_44, %c0_45] : memref<9x12x128xbf16, #tpu.memory_space<vmem>>, vector<1x12x128xbf16>
    %41 = vector.shape_cast %40 : vector<1x12x128xbf16> to vector<12x128xbf16>
    %cst_46 = arith.constant dense<0.000000e+00> : vector<64x128xf32>
    %42 = tpu.matmul %39, %41, %cst_46 {dimension_numbers = #tpu.dot_dimension_numbers<[1], [0], [0], [1], [0, 0, 1, 1], [], []>} : vector<64x12xbf16>, vector<12x128xbf16>, vector<64x128xf32> -> vector<64x128xf32>
    %43 = arith.addf %37, %42 : vector<64x128xf32>
    %c0_47 = arith.constant 0 : index
    %c0_48 = arith.constant 0 : index
    %c8_49 = arith.constant 8 : index
    %c0_50 = arith.constant 0 : index
    %44 = vector.load %arg3[%c0_47, %c0_48, %c8_49, %c0_50] : memref<1x2x80x12xbf16, #tpu.memory_space<vmem>>, vector<1x1x64x12xbf16>
    %45 = vector.shape_cast %44 : vector<1x1x64x12xbf16> to vector<64x12xbf16>
    %c7_51 = arith.constant 7 : index
    %c0_52 = arith.constant 0 : index
    %c0_53 = arith.constant 0 : index
    %46 = vector.load %arg4[%c7_51, %c0_52, %c0_53] : memref<9x12x128xbf16, #tpu.memory_space<vmem>>, vector<1x12x128xbf16>
    %47 = vector.shape_cast %46 : vector<1x12x128xbf16> to vector<12x128xbf16>
    %cst_54 = arith.constant dense<0.000000e+00> : vector<64x128xf32>
    %48 = tpu.matmul %45, %47, %cst_54 {dimension_numbers = #tpu.dot_dimension_numbers<[1], [0], [0], [1], [0, 0, 1, 1], [], []>} : vector<64x12xbf16>, vector<12x128xbf16>, vector<64x128xf32> -> vector<64x128xf32>
    %49 = arith.addf %43, %48 : vector<64x128xf32>
    %c0_55 = arith.constant 0 : index
    %c0_56 = arith.constant 0 : index
    %c16_57 = arith.constant 16 : index
    %c0_58 = arith.constant 0 : index
    %50 = vector.load %arg3[%c0_55, %c0_56, %c16_57, %c0_58] : memref<1x2x80x12xbf16, #tpu.memory_space<vmem>>, vector<1x1x64x12xbf16>
    %51 = vector.shape_cast %50 : vector<1x1x64x12xbf16> to vector<64x12xbf16>
    %c8_59 = arith.constant 8 : index
    %c0_60 = arith.constant 0 : index
    %c0_61 = arith.constant 0 : index
    %52 = vector.load %arg4[%c8_59, %c0_60, %c0_61] : memref<9x12x128xbf16, #tpu.memory_space<vmem>>, vector<1x12x128xbf16>
    %53 = vector.shape_cast %52 : vector<1x12x128xbf16> to vector<12x128xbf16>
    %cst_62 = arith.constant dense<0.000000e+00> : vector<64x128xf32>
    %54 = tpu.matmul %51, %53, %cst_62 {dimension_numbers = #tpu.dot_dimension_numbers<[1], [0], [0], [1], [0, 0, 1, 1], [], []>} : vector<64x12xbf16>, vector<12x128xbf16>, vector<64x128xf32> -> vector<64x128xf32>
    %55 = arith.addf %49, %54 : vector<64x128xf32>
    %c0_63 = arith.constant 0 : index
    %c6_64 = arith.constant 6 : index
    %c0_65 = arith.constant 0 : index
    %c0_66 = arith.constant 0 : index
    %56 = vector.load %arg5[%c0_63, %c6_64, %c0_65, %c0_66] : memref<1x8x64x128xf32, #tpu.memory_space<vmem>>, vector<1x1x64x128xf32>
    %57 = vector.shape_cast %56 : vector<1x1x64x128xf32> to vector<64x128xf32>
    %58 = vector.shape_cast %55 : vector<64x128xf32> to vector<1x1x64x128xf32>
    tpu.vector_store %arg5[%c0_63, %c6_64, %c0_65, %c0_66], %58 {strides = array<i32>} : memref<1x8x64x128xf32, #tpu.memory_space<vmem>>, vector<1x1x64x128xf32>,
    %cst_67 = arith.constant 0.000000e+00 : f32
    %59 = vector.broadcast %cst_67 : f32 to vector<64x128xf32>
    %c0_68 = arith.constant 0 : index
    %c7_69 = arith.constant 7 : index
    %c0_70 = arith.constant 0 : index
    %c0_71 = arith.constant 0 : index
    %60 = vector.load %arg2[%c0_68, %c7_69, %c0_70, %c0_71] : memref<1x8x80x12xbf16, #tpu.memory_space<vmem>>, vector<1x1x64x12xbf16>
    %61 = vector.shape_cast %60 : vector<1x1x64x12xbf16> to vector<64x12xbf16>
    %c0_72 = arith.constant 0 : index
    %c0_73 = arith.constant 0 : index
    %c0_74 = arith.constant 0 : index
    %62 = vector.load %arg4[%c0_72, %c0_73, %c0_74] : memref<9x12x128xbf16, #tpu.memory_space<vmem>>, vector<1x12x128xbf16>
    %63 = vector.shape_cast %62 : vector<1x12x128xbf16> to vector<12x128xbf16>
    %cst_75 = arith.constant dense<0.000000e+00> : vector<64x128xf32>
    %64 = tpu.matmul %61, %63, %cst_75 {dimension_numbers = #tpu.dot_dimension_numbers<[1], [0], [0], [1], [0, 0, 1, 1], [], []>} : vector<64x12xbf16>, vector<12x128xbf16>, vector<64x128xf32> -> vector<64x128xf32>
    %65 = arith.addf %59, %64 : vector<64x128xf32>
    %c0_76 = arith.constant 0 : index
    %c7_77 = arith.constant 7 : index
    %c8_78 = arith.constant 8 : index
    %c0_79 = arith.constant 0 : index
    %66 = vector.load %arg2[%c0_76, %c7_77, %c8_78, %c0_79] : memref<1x8x80x12xbf16, #tpu.memory_space<vmem>>, vector<1x1x64x12xbf16>
    %67 = vector.shape_cast %66 : vector<1x1x64x12xbf16> to vector<64x12xbf16>
    %c1_80 = arith.constant 1 : index
    %c0_81 = arith.constant 0 : index
    %c0_82 = arith.constant 0 : index
    %68 = vector.load %arg4[%c1_80, %c0_81, %c0_82] : memref<9x12x128xbf16, #tpu.memory_space<vmem>>, vector<1x12x128xbf16>
    %69 = vector.shape_cast %68 : vector<1x12x128xbf16> to vector<12x128xbf16>
    %cst_83 = arith.constant dense<0.000000e+00> : vector<64x128xf32>
    %70 = tpu.matmul %67, %69, %cst_83 {dimension_numbers = #tpu.dot_dimension_numbers<[1], [0], [0], [1], [0, 0, 1, 1], [], []>} : vector<64x12xbf16>, vector<12x128xbf16>, vector<64x128xf32> -> vector<64x128xf32>
    %71 = arith.addf %65, %70 : vector<64x128xf32>
    %c0_84 = arith.constant 0 : index
    %c7_85 = arith.constant 7 : index
    %c16_86 = arith.constant 16 : index
    %c0_87 = arith.constant 0 : index
    %72 = vector.load %arg2[%c0_84, %c7_85, %c16_86, %c0_87] : memref<1x8x80x12xbf16, #tpu.memory_space<vmem>>, vector<1x1x64x12xbf16>
    %73 = vector.shape_cast %72 : vector<1x1x64x12xbf16> to vector<64x12xbf16>
    %c2_88 = arith.constant 2 : index
    %c0_89 = arith.constant 0 : index
    %c0_90 = arith.constant 0 : index
    %74 = vector.load %arg4[%c2_88, %c0_89, %c0_90] : memref<9x12x128xbf16, #tpu.memory_space<vmem>>, vector<1x12x128xbf16>
    %75 = vector.shape_cast %74 : vector<1x12x128xbf16> to vector<12x128xbf16>
    %cst_91 = arith.constant dense<0.000000e+00> : vector<64x128xf32>
    %76 = tpu.matmul %73, %75, %cst_91 {dimension_numbers = #tpu.dot_dimension_numbers<[1], [0], [0], [1], [0, 0, 1, 1], [], []>} : vector<64x12xbf16>, vector<12x128xbf16>, vector<64x128xf32> -> vector<64x128xf32>
    %77 = arith.addf %71, %76 : vector<64x128xf32>
    %c0_92 = arith.constant 0 : index
    %c0_93 = arith.constant 0 : index
    %c0_94 = arith.constant 0 : index
    %c0_95 = arith.constant 0 : index
    %78 = vector.load %arg3[%c0_92, %c0_93, %c0_94, %c0_95] : memref<1x2x80x12xbf16, #tpu.memory_space<vmem>>, vector<1x1x64x12xbf16>
    %79 = vector.shape_cast %78 : vector<1x1x64x12xbf16> to vector<64x12xbf16>
    %c3_96 = arith.constant 3 : index
    %c0_97 = arith.constant 0 : index
    %c0_98 = arith.constant 0 : index
    %80 = vector.load %arg4[%c3_96, %c0_97, %c0_98] : memref<9x12x128xbf16, #tpu.memory_space<vmem>>, vector<1x12x128xbf16>
    %81 = vector.shape_cast %80 : vector<1x12x128xbf16> to vector<12x128xbf16>
    %cst_99 = arith.constant dense<0.000000e+00> : vector<64x128xf32>
    %82 = tpu.matmul %79, %81, %cst_99 {dimension_numbers = #tpu.dot_dimension_numbers<[1], [0], [0], [1], [0, 0, 1, 1], [], []>} : vector<64x12xbf16>, vector<12x128xbf16>, vector<64x128xf32> -> vector<64x128xf32>
    %83 = arith.addf %77, %82 : vector<64x128xf32>
    %c0_100 = arith.constant 0 : index
    %c0_101 = arith.constant 0 : index
    %c8_102 = arith.constant 8 : index
    %c0_103 = arith.constant 0 : index
    %84 = vector.load %arg3[%c0_100, %c0_101, %c8_102, %c0_103] : memref<1x2x80x12xbf16, #tpu.memory_space<vmem>>, vector<1x1x64x12xbf16>
    %85 = vector.shape_cast %84 : vector<1x1x64x12xbf16> to vector<64x12xbf16>
    %c4_104 = arith.constant 4 : index
    %c0_105 = arith.constant 0 : index
    %c0_106 = arith.constant 0 : index
    %86 = vector.load %arg4[%c4_104, %c0_105, %c0_106] : memref<9x12x128xbf16, #tpu.memory_space<vmem>>, vector<1x12x128xbf16>
    %87 = vector.shape_cast %86 : vector<1x12x128xbf16> to vector<12x128xbf16>
    %cst_107 = arith.constant dense<0.000000e+00> : vector<64x128xf32>
    %88 = tpu.matmul %85, %87, %cst_107 {dimension_numbers = #tpu.dot_dimension_numbers<[1], [0], [0], [1], [0, 0, 1, 1], [], []>} : vector<64x12xbf16>, vector<12x128xbf16>, vector<64x128xf32> -> vector<64x128xf32>
    %89 = arith.addf %83, %88 : vector<64x128xf32>
    %c0_108 = arith.constant 0 : index
    %c0_109 = arith.constant 0 : index
    %c16_110 = arith.constant 16 : index
    %c0_111 = arith.constant 0 : index
    %90 = vector.load %arg3[%c0_108, %c0_109, %c16_110, %c0_111] : memref<1x2x80x12xbf16, #tpu.memory_space<vmem>>, vector<1x1x64x12xbf16>
    %91 = vector.shape_cast %90 : vector<1x1x64x12xbf16> to vector<64x12xbf16>
    %c5_112 = arith.constant 5 : index
    %c0_113 = arith.constant 0 : index
    %c0_114 = arith.constant 0 : index
    %92 = vector.load %arg4[%c5_112, %c0_113, %c0_114] : memref<9x12x128xbf16, #tpu.memory_space<vmem>>, vector<1x12x128xbf16>
    %93 = vector.shape_cast %92 : vector<1x12x128xbf16> to vector<12x128xbf16>
    %cst_115 = arith.constant dense<0.000000e+00> : vector<64x128xf32>
    %94 = tpu.matmul %91, %93, %cst_115 {dimension_numbers = #tpu.dot_dimension_numbers<[1], [0], [0], [1], [0, 0, 1, 1], [], []>} : vector<64x12xbf16>, vector<12x128xbf16>, vector<64x128xf32> -> vector<64x128xf32>
    %95 = arith.addf %89, %94 : vector<64x128xf32>
    %c0_116 = arith.constant 0 : index
    %c1_117 = arith.constant 1 : index
    %c0_118 = arith.constant 0 : index
    %c0_119 = arith.constant 0 : index
    %96 = vector.load %arg3[%c0_116, %c1_117, %c0_118, %c0_119] : memref<1x2x80x12xbf16, #tpu.memory_space<vmem>>, vector<1x1x64x12xbf16>
    %97 = vector.shape_cast %96 : vector<1x1x64x12xbf16> to vector<64x12xbf16>
    %c6_120 = arith.constant 6 : index
    %c0_121 = arith.constant 0 : index
    %c0_122 = arith.constant 0 : index
    %98 = vector.load %arg4[%c6_120, %c0_121, %c0_122] : memref<9x12x128xbf16, #tpu.memory_space<vmem>>, vector<1x12x128xbf16>
    %99 = vector.shape_cast %98 : vector<1x12x128xbf16> to vector<12x128xbf16>
    %cst_123 = arith.constant dense<0.000000e+00> : vector<64x128xf32>
    %100 = tpu.matmul %97, %99, %cst_123 {dimension_numbers = #tpu.dot_dimension_numbers<[1], [0], [0], [1], [0, 0, 1, 1], [], []>} : vector<64x12xbf16>, vector<12x128xbf16>, vector<64x128xf32> -> vector<64x128xf32>
    %101 = arith.addf %95, %100 : vector<64x128xf32>
    %c0_124 = arith.constant 0 : index
    %c1_125 = arith.constant 1 : index
    %c8_126 = arith.constant 8 : index
    %c0_127 = arith.constant 0 : index
    %102 = vector.load %arg3[%c0_124, %c1_125, %c8_126, %c0_127] : memref<1x2x80x12xbf16, #tpu.memory_space<vmem>>, vector<1x1x64x12xbf16>
    %103 = vector.shape_cast %102 : vector<1x1x64x12xbf16> to vector<64x12xbf16>
    %c7_128 = arith.constant 7 : index
    %c0_129 = arith.constant 0 : index
    %c0_130 = arith.constant 0 : index
    %104 = vector.load %arg4[%c7_128, %c0_129, %c0_130] : memref<9x12x128xbf16, #tpu.memory_space<vmem>>, vector<1x12x128xbf16>
    %105 = vector.shape_cast %104 : vector<1x12x128xbf16> to vector<12x128xbf16>
    %cst_131 = arith.constant dense<0.000000e+00> : vector<64x128xf32>
    %106 = tpu.matmul %103, %105, %cst_131 {dimension_numbers = #tpu.dot_dimension_numbers<[1], [0], [0], [1], [0, 0, 1, 1], [], []>} : vector<64x12xbf16>, vector<12x128xbf16>, vector<64x128xf32> -> vector<64x128xf32>
    %107 = arith.addf %101, %106 : vector<64x128xf32>
    %c0_132 = arith.constant 0 : index
    %c1_133 = arith.constant 1 : index
    %c16_134 = arith.constant 16 : index
    %c0_135 = arith.constant 0 : index
    %108 = vector.load %arg3[%c0_132, %c1_133, %c16_134, %c0_135] : memref<1x2x80x12xbf16, #tpu.memory_space<vmem>>, vector<1x1x64x12xbf16>
    %109 = vector.shape_cast %108 : vector<1x1x64x12xbf16> to vector<64x12xbf16>
    %c8_136 = arith.constant 8 : index
    %c0_137 = arith.constant 0 : index
    %c0_138 = arith.constant 0 : index
    %110 = vector.load %arg4[%c8_136, %c0_137, %c0_138] : memref<9x12x128xbf16, #tpu.memory_space<vmem>>, vector<1x12x128xbf16>
    %111 = vector.shape_cast %110 : vector<1x12x128xbf16> to vector<12x128xbf16>
    %cst_139 = arith.constant dense<0.000000e+00> : vector<64x128xf32>
    %112 = tpu.matmul %109, %111, %cst_139 {dimension_numbers = #tpu.dot_dimension_numbers<[1], [0], [0], [1], [0, 0, 1, 1], [], []>} : vector<64x12xbf16>, vector<12x128xbf16>, vector<64x128xf32> -> vector<64x128xf32>
    %113 = arith.addf %107, %112 : vector<64x128xf32>
    %c0_140 = arith.constant 0 : index
    %c7_141 = arith.constant 7 : index
    %c0_142 = arith.constant 0 : index
    %c0_143 = arith.constant 0 : index
    %114 = vector.load %arg5[%c0_140, %c7_141, %c0_142, %c0_143] : memref<1x8x64x128xf32, #tpu.memory_space<vmem>>, vector<1x1x64x128xf32>
    %115 = vector.shape_cast %114 : vector<1x1x64x128xf32> to vector<64x128xf32>
    %116 = vector.shape_cast %113 : vector<64x128xf32> to vector<1x1x64x128xf32>
    tpu.vector_store %arg5[%c0_140, %c7_141, %c0_142, %c0_143], %116 {strides = array<i32>} : memref<1x8x64x128xf32, #tpu.memory_space<vmem>>, vector<1x1x64x128xf32>,
    return
  }
  func.func @transform_0(%arg0: i32, %arg1: i32) -> (i32, i32, i32, i32) {
    %c0_i32 = arith.constant 0 : i32
    %c0_i32_0 = arith.constant 0 : i32
    %c0_i32_1 = arith.constant 0 : i32
    return %arg0, %arg1, %c0_i32, %c0_i32_0 : i32, i32, i32, i32
  }
  func.func @transform_1(%arg0: i32, %arg1: i32) -> (i32, i32, i32, i32) {
    %c1_i32 = arith.constant 1 : i32
    %0 = arith.addi %arg1, %c1_i32 : i32
    %c4_i32 = arith.constant 4 : i32
    %1 = arith.muli %0, %c4_i32 : i32
    %c0_i32 = arith.constant 0 : i32
    %c0_i32_0 = arith.constant 0 : i32
    %c0_i32_1 = arith.constant 0 : i32
    return %arg0, %1, %c0_i32, %c0_i32_0 : i32, i32, i32, i32
  }
  func.func @transform_2(%arg0: i32, %arg1: i32) -> (i32, i32, i32) {
    %c0_i32 = arith.constant 0 : i32
    %c0_i32_0 = arith.constant 0 : i32
    %c0_i32_1 = arith.constant 0 : i32
    %c0_i32_2 = arith.constant 0 : i32
    return %c0_i32, %c0_i32_0, %c0_i32_1 : i32, i32, i32
  }
  func.func @transform_3(%arg0: i32, %arg1: i32) -> (i32, i32, i32, i32) {
    %c0_i32 = arith.constant 0 : i32
    %c0_i32_0 = arith.constant 0 : i32
    %c0_i32_1 = arith.constant 0 : i32
    return %arg0, %arg1, %c0_i32, %c0_i32_0 : i32, i32, i32, i32
  }
}

</mosaic_0001>

<llo_original>
// kernel: cdc_t_forward.1
$region0: #{cdc_t_forward.1}
  #allocation0 [shape = 'u32[]', space=smem, size = 0x4, offset = 0x4, fixed_abs, tag = 'smem constant byte address 0x4 - core index']
  #allocation1 [shape = 'u32[72,128]{1,0:T(1,128)}', space=vmem, size = 0x9000, scoped, tag = 'internal scratch']
  %s0 = inlined_call_operand.vmem [shape: bf16[2,10,80,12], index: 0, kind: input, shape index: {}, may-alias: {0,1}]
  %s1 = inlined_call_operand.vmem [shape: bf16[2,10,80,12], index: 1, kind: input, shape index: {}, may-alias: {0,1}]
  %s2 = inlined_call_operand.vmem [shape: bf16[9,12,128], index: 2, kind: input, shape index: {}]
  %s3 = inlined_call_operand.vmem [shape: f32[2,8,64,128], index: 3, kind: output, shape index: {}]
  %s4 = sld [smem:[#allocation0]]
  $region52: #{cdc_t_forward.1} parent=0
    _
  %s6 = ssub.s32 1, %s4
  %s7 = scalar_select 0, %s6, %s4
  loop: start=0, step=1, limit=4
  $region2: #{cdc_t_forward.1} parent=0 // loop_pre_header
    _
  $region3: #{cdc_t_forward.1} parent=0 // loop_header
    %s9 = sphi 0, %s13
    %p10 = scmp.ge.s32.totalorder %s9, 4
    %s16 = sphi 0, %s28
    %s17 = sphi 0, %s24
    %s18 = sphi 0, %s16
    %s19 = sphi 0, %s17
    %s20 = sphi 0, %s18
    %s21 = sphi 0, %s19
    %s33 = sphi 0, %s35
    %s36 = sphi 0, %s33
    %s37 = sphi 0, %s36
    %s53 = sphi 0, %s37
    %s65 = sphi 0, %s67
    %s68 = sphi 0, %s65
    %s69 = sphi 0, %s68
    %s85 = sphi 0, %s69
    %s89 = sphi 0, %s89
    %s91 = sphi 0, %s89
    %s92 = sphi 0, %s91
    %s106 = sphi 0, %s92
    %s114 = sphi 0, %s116
    %s117 = sphi 0, %s114
    %s118 = sphi 0, %s117
    %s134 = sphi 0, %s118
  $region4: #{cdc_t_forward.1} parent=0 // loop_header_branch
    %12 = sbr.rel (%p10) target = $region8
  $region5: #{cdc_t_forward.1} parent=0 // loop_body
    %s14 = ssub.s32 %s9, 1
    %s15 = ssub.s32 %s9, 2
    %s22 = sadd.s32 1, %s17
    %p23 = scmp.ge.s32.totalorder %s22, 1
    %s24 = scalar_select %p23, 0, %s22
    %s25 = sadd.s32 1, %s16
    %s26 = scalar_select %p23, %s25, %s16
    %p27 = scmp.ge.s32.totalorder %s26, 2
    %s28 = scalar_select %p27, 0, %s26
    %s29 = ssub.s32 %s16, %s28
    %s30 = ssub.s32 %s17, %s24
    %s31 = sor.u32 %s29, %s30
    %p32 = scmp.eq.s32.totalorder %s31, 0
    %s34 = sadd.s32 %s33, 1
    %s35 = scalar_select %p32, %s33, %s34
    %p38 = pneg %p32
    %p39 = scmp.eq.s32.totalorder %s9, 1
    %p40 = por %p38, %p39
    %p41 = scmp.ne.s32.totalorder %s33, %s36
    %p42 = scmp.eq.s32.totalorder %s9, 0
    %p43 = por %p41, %p42
    %p44 = scmp.ne.s32.totalorder %s33, %s36
    %p45 = scmp.eq.s32.totalorder %s14, 1
    %p46 = por %p44, %p45
    %p47 = scmp.ne.s32.totalorder %s36, %s37
    %p48 = scmp.eq.s32.totalorder %s14, 0
    %p49 = por %p47, %p48
    %p50 = scmp.ne.s32.totalorder %s36, %s37
    %p51 = scmp.eq.s32.totalorder %s15, 1
    %p52 = por %p50, %p51
    %p54 = scmp.ne.s32.totalorder %s37, %s53
    %p55 = scmp.eq.s32.totalorder %s15, 0
    %p56 = por %p54, %p55
    %s57 = sadd.s32 %s17, 1
    %s58 = smul.u32 %s57, 4
    %s59 = sadd.s32 %s24, 1
    %s60 = smul.u32 %s59, 4
    %s61 = ssub.s32 %s16, %s28
    %s62 = ssub.s32 %s58, %s60
    %s63 = sor.u32 %s61, %s62
    %p64 = scmp.eq.s32.totalorder %s63, 0
    %s66 = sadd.s32 %s65, 1
    %s67 = scalar_select %p64, %s65, %s66
    %p70 = pneg %p64
    %p71 = scmp.eq.s32.totalorder %s9, 1
    %p72 = por %p70, %p71
    %p73 = scmp.ne.s32.totalorder %s65, %s68
    %p74 = scmp.eq.s32.totalorder %s9, 0
    %p75 = por %p73, %p74
    %p76 = scmp.ne.s32.totalorder %s65, %s68
    %p77 = scmp.eq.s32.totalorder %s14, 1
    %p78 = por %p76, %p77
    %p79 = scmp.ne.s32.totalorder %s68, %s69
    %p80 = scmp.eq.s32.totalorder %s14, 0
    %p81 = por %p79, %p80
    %p82 = scmp.ne.s32.totalorder %s68, %s69
    %p83 = scmp.eq.s32.totalorder %s15, 1
    %p84 = por %p82, %p83
    %p86 = scmp.ne.s32.totalorder %s69, %s85
    %p87 = scmp.eq.s32.totalorder %s15, 0
    %p88 = por %p86, %p87
    %s90 = sadd.s32 %s89, 1
    %p93 = scmp.eq.s32.totalorder %s9, 1
    %p94 = scmp.ne.s32.totalorder %s89, %s91
    %p95 = scmp.eq.s32.totalorder %s9, 0
    %p96 = por %p94, %p95
    %p97 = scmp.ne.s32.totalorder %s89, %s91
    %p98 = scmp.eq.s32.totalorder %s14, 1
    %p99 = por %p97, %p98
    %p100 = scmp.ne.s32.totalorder %s91, %s92
    %p101 = scmp.eq.s32.totalorder %s14, 0
    %p102 = por %p100, %p101
    %p103 = scmp.ne.s32.totalorder %s91, %s92
    %p104 = scmp.eq.s32.totalorder %s15, 1
    %p105 = por %p103, %p104
    %p107 = scmp.ne.s32.totalorder %s92, %s106
    %p108 = scmp.eq.s32.totalorder %s15, 0
    %p109 = por %p107, %p108
    %s110 = ssub.s32 %s16, %s28
    %s111 = ssub.s32 %s17, %s24
    %s112 = sor.u32 %s110, %s111
    %p113 = scmp.eq.s32.totalorder %s112, 0
    %s115 = sadd.s32 %s114, 1
    %s116 = scalar_select %p113, %s114, %s115
    %p119 = pneg %p113
    %p120 = scmp.eq.s32.totalorder %s9, 1
    %p121 = por %p119, %p120
    %p122 = scmp.ne.s32.totalorder %s114, %s117
    %p123 = scmp.eq.s32.totalorder %s9, 0
    %p124 = por %p122, %p123
    %p125 = scmp.ne.s32.totalorder %s114, %s117
    %p126 = scmp.eq.s32.totalorder %s14, 1
    %p127 = por %p125, %p126
    %p128 = scmp.ne.s32.totalorder %s117, %s118
    %p129 = scmp.eq.s32.totalorder %s14, 0
    %p130 = por %p128, %p129
    %p131 = scmp.ne.s32.totalorder %s117, %s118
    %p132 = scmp.eq.s32.totalorder %s15, 1
    %p133 = por %p131, %p132
    %p135 = scmp.ne.s32.totalorder %s118, %s134
    %p136 = scmp.eq.s32.totalorder %s15, 0
    %p137 = por %p135, %p136
    %p138 = scmp.le.s32.totalorder 1, %s9
    %p139 = scmp.lt.s32.totalorder %s9, 3
    %p140 = pnand %p138, %p139
    %p141 = pneg %p140
    // Predicated region
    $region9: #{cdc_t_forward.1} parent=5 // pred_check
      _
    $region10: #{cdc_t_forward.1} parent=5 // pred_check_branch
      %143 = sbr.rel (%p140) target = $region12
    $region11: #{cdc_t_forward.1} parent=5 // pred_region
      %s144 = ssub.s32 %s9, 1
      // Predicated region
      $region13: #{cdc_t_forward.1} parent=11 // pred_check
        %p145 = pneg %p102
      $region14: #{cdc_t_forward.1} parent=11 // pred_check_branch
        %147 = sbr.rel (%p145) target = $region16
      $region15: #{cdc_t_forward.1} parent=11 // pred_region
        _
      $region16: #{cdc_t_forward.1} parent=11 // pred_fallthru
        _
    $region12: #{cdc_t_forward.1} parent=5 // pred_fallthru
      _
    %p148 = scmp.lt.s32.totalorder %s9, 2
    // Predicated region
    $region17: #{cdc_t_forward.1} parent=5 // pred_check
      %p149 = pneg %p148
    $region18: #{cdc_t_forward.1} parent=5 // pred_check_branch
      %151 = sbr.rel (%p149) target = $region20
    $region19: #{cdc_t_forward.1} parent=5 // pred_region
      // Predicated region
      $region21: #{cdc_t_forward.1} parent=19 // pred_check
        %p152 = pneg %p43
      $region22: #{cdc_t_forward.1} parent=19 // pred_check_branch
        %154 = sbr.rel (%p152) target = $region24
      $region23: #{cdc_t_forward.1} parent=19 // pred_region
        %s155 = smul.u32 8, %s17
        %s156 = ssub.s32 10, %s155
        %p157 = scmp.lt.s32.totalorder %s156, 8
        %s158 = scalar_select %p157, %s156, 8
        %s159 = smul.u32 4, %s158
        %s160 = smul.u32 %s159, 10
        %p161 = scmp.lt.s32.totalorder %s16, 1
        %s162 = scalar_select %p161, %s16, 1
        %p163 = scmp.lt.s32.totalorder %s155, 9
        %s164 = scalar_select %p163, %s155, 9
        %s165 = smul.addr %s164, 10
        %s166 = smul.addr %s162, 100
        %s167 = sadd.s32 %s165, %s166
        %s168 = smul.addr %s167, 4
        %s169 = scalar_lea.vmem %s0, %s168
        %s170 = smul.u32 8, %s17
        %s171 = ssub.s32 10, %s170
        %p172 = scmp.lt.s32.totalorder %s171, 8
        %s173 = scalar_select %p172, %s171, 8
        %s174 = smul.u32 4, %s173
        %s175 = smul.u32 %s174, 10
      $region24: #{cdc_t_forward.1} parent=19 // pred_fallthru
        _
      // Predicated region
      $region25: #{cdc_t_forward.1} parent=19 // pred_check
        %p176 = pneg %p75
      $region26: #{cdc_t_forward.1} parent=19 // pred_check_branch
        %178 = sbr.rel (%p176) target = $region28
      $region27: #{cdc_t_forward.1} parent=19 // pred_region
        %s179 = sadd.s32 %s17, 1
        %s180 = smul.u32 %s179, 4
        %s181 = smul.u32 2, %s180
        %p182 = scmp.lt.s32.totalorder %s16, 1
        %s183 = scalar_select %p182, %s16, 1
        %p184 = scmp.lt.s32.totalorder %s181, 9
        %s185 = scalar_select %p184, %s181, 9
        %s186 = smul.addr %s185, 10
        %s187 = smul.addr %s183, 100
        %s188 = sadd.s32 %s186, %s187
        %s189 = smul.addr %s188, 4
        %s190 = scalar_lea.vmem %s1, %s189
        %s191 = sadd.s32 %s17, 1
        %s192 = smul.u32 %s191, 4
        %s193 = smul.u32 2, %s192
      $region28: #{cdc_t_forward.1} parent=19 // pred_fallthru
        _
    $region20: #{cdc_t_forward.1} parent=5 // pred_fallthru
      _
    %p194 = scmp.le.s32.totalorder 1, %s9
    %p195 = scmp.lt.s32.totalorder %s9, 3
    %p196 = pnand %p194, %p195
    %p197 = pneg %p196
    // Predicated region
    $region29: #{cdc_t_forward.1} parent=5 // pred_check
      _
    $region30: #{cdc_t_forward.1} parent=5 // pred_check_branch
      %199 = sbr.rel (%p196) target = $region32
    $region31: #{cdc_t_forward.1} parent=5 // pred_region
      %s200 = ssub.s32 %s9, 1
      %s201 = smul.u32 8, %s19
      %s202 = ssub.s32 10, %s201
      %p203 = scmp.lt.s32.totalorder %s202, 8
      %s204 = scalar_select %p203, %s202, 8
      %s205 = smul.u32 4, %s204
      %s206 = smul.u32 %s205, 10
      %p207 = scmp.lt.s32.totalorder %s18, 1
      %s208 = scalar_select %p207, %s18, 1
      %p209 = scmp.lt.s32.totalorder %s201, 9
      %s210 = scalar_select %p209, %s201, 9
      %s211 = smul.addr %s210, 10
      %s212 = smul.addr %s208, 100
      %s213 = sadd.s32 %s211, %s212
      %s214 = smul.addr %s213, 4
      %s215 = scalar_lea.vmem %s0, %s214
      %p216 = pneg %p49
      %p217 = pneg %p46
      %s218 = sadd.s32 %s19, 1
      %s219 = smul.u32 %s218, 4
      %s220 = smul.u32 2, %s219
      %p221 = scmp.lt.s32.totalorder %s18, 1
      %s222 = scalar_select %p221, %s18, 1
      %p223 = scmp.lt.s32.totalorder %s220, 9
      %s224 = scalar_select %p223, %s220, 9
      %s225 = smul.addr %s224, 10
      %s226 = smul.addr %s222, 100
      %s227 = sadd.s32 %s225, %s226
      %s228 = smul.addr %s227, 4
      %s229 = scalar_lea.vmem %s1, %s228
      %p230 = pneg %p81
      %p231 = pneg %p78
      %p232 = pneg %p102
      %p233 = pneg %p99
      %p234 = pneg %p130
      %p235 = pneg %p127
      %s236 = smul.u32 8, %s19
      %p237 = scmp.lt.s32.totalorder %s18, 1
      %s238 = scalar_select %p237, %s18, 1
      %p239 = scmp.lt.s32.totalorder %s236, 7
      %s240 = scalar_select %p239, %s236, 7
      %s241 = smul.addr %s240, 8
      %s242 = smul.addr %s238, 64
      %s243 = sadd.s32 %s241, %s242
      %s244 = smul.addr %s243, 8
      %s245 = scalar_lea.vmem %s3, %s244
      %s246 = smul.u32 8, %s19
      %s247 = ssub.s32 10, %s246
      %p248 = scmp.lt.s32.totalorder %s247, 8
      %s249 = scalar_select %p248, %s247, 8
      %s250 = smul.u32 4, %s249
      %s251 = smul.u32 %s250, 10
      %p252 = scmp.lt.s32.totalorder %s18, 1
      %s253 = scalar_select %p252, %s18, 1
      %p254 = scmp.lt.s32.totalorder %s246, 9
      %s255 = scalar_select %p254, %s246, 9
      %s256 = smul.addr %s255, 10
      %s257 = smul.addr %s253, 100
      %s258 = sadd.s32 %s256, %s257
      %s259 = smul.addr %s258, 4
      %s260 = scalar_lea.vmem %s0, %s259
      %s261 = smul.u32 8, %s19
      %s262 = ssub.s32 10, %s261
      %p263 = scmp.lt.s32.totalorder %s262, 8
      %s264 = scalar_select %p263, %s262, 8
      %s265 = smul.u32 4, %s264
      %s266 = smul.u32 %s265, 10
      %s267 = sadd.s32 %s19, 1
      %s268 = smul.u32 %s267, 4
      %s269 = smul.u32 2, %s268
      %p270 = scmp.lt.s32.totalorder %s18, 1
      %s271 = scalar_select %p270, %s18, 1
      %p272 = scmp.lt.s32.totalorder %s269, 9
      %s273 = scalar_select %p272, %s269, 9
      %s274 = smul.addr %s273, 10
      %s275 = smul.addr %s271, 100
      %s276 = sadd.s32 %s274, %s275
      %s277 = smul.addr %s276, 4
      %s278 = scalar_lea.vmem %s1, %s277
      %s279 = sadd.s32 %s19, 1
      %s280 = smul.u32 %s279, 4
      %s281 = smul.u32 2, %s280
      %s282 = smul.u32 8, %s19
      %p283 = scmp.lt.s32.totalorder %s18, 1
      %s284 = scalar_select %p283, %s18, 1
      %p285 = scmp.lt.s32.totalorder %s282, 7
      %s286 = scalar_select %p285, %s282, 7
      %s287 = smul.addr %s286, 8
      %s288 = smul.addr %s284, 64
      %s289 = sadd.s32 %s287, %s288
      %s290 = smul.addr %s289, 8
      %s291 = scalar_lea.vmem %s3, %s290
      %s292 = smul.u32 8, %s19
      loop: start=0, step=1, limit=6
      $region33: #{cdc_t_forward.1} parent=31 // loop_pre_header
        _
      $region34: #{cdc_t_forward.1} parent=31 // loop_header
        %s295 = sphi 0, %s299
        %p296 = scmp.ge.s32.totalorder %s295, 6
      $region35: #{cdc_t_forward.1} parent=31 // loop_header_branch
        %298 = sbr.rel (%p296) target = $region39
      $region36: #{cdc_t_forward.1} parent=31 // loop_body
        %s300 = smul.u32 %s295, 10
        %s301 = smul.addr %s300, 4
        %s302 = scalar_lea.vmem %s260, %s301
        %v303 = vld [vmem:[%s302] sm:$0xf]
        %v304 = vld [vmem:[%s302 + $0x4] sm:$0xf]
        %v305 = vld [vmem:[%s302 + $0x8] sm:$0xf]
        %v306 = vld [vmem:[%s302 + $0xc] sm:$0xf]
        %v307 = vld [vmem:[%s302 + $0x10] sm:$0xf]
        %v308 = vld [vmem:[%s302 + $0x14] sm:$0xf]
        %v309 = vld [vmem:[%s302 + $0x18] sm:$0xf]
        %v310 = vld [vmem:[%s302 + $0x1c] sm:$0xf]
        %v311 = vld [vmem:[%s2] sm:$0xf]
        %v312 = vld [vmem:[%s2 + $0x4] sm:$0x3]
        %v313 = vld [vmem:[%s302 + $0x20] sm:$0xf]
        %s314 = scalar_lea.vmem %s2, 8
        %v315 = vld [vmem:[%s314] sm:$0xf]
        %v316 = vld [vmem:[%s314 + $0x4] sm:$0x3]
        %v325 = vunpack.c.l.b16 %v304
        %v326 = vunpack.c.l.b16 %v305
        %v327 = vunpack.c.l.b16 %v306
        %v328 = vunpack.c.l.b16 %v307
        %v329 = vunpack.c.l.b16 %v308
        %v330 = vunpack.c.l.b16 %v309
        %v331 = vunpack.c.l.b16 %v310
        %v332 = vunpack.c.l.b16 %v313
        %v333 = vpack.c.b16 %v326, %v325
        %v334 = vpack.c.b16 %v328, %v327
        %v335 = vpack.c.b16 %v330, %v329
        %v336 = vpack.c.b16 %v332, %v331
        %v339 = vunpack.c.l.b16 %v315
        %v340 = vunpack.c.l.b16 %v316
        %v341 = vpack.c.b16 %v340, %v339
        %vm342 = vcmask 97280
        %v344 = vsel %vm342, %v333, 0
        %v347 = vsel %vm342, %v334, 0
        %v350 = vsel %vm342, %v335, 0
        %v353 = vsel %vm342, %v336, 0
        %vm355 = vcmask 1045504
        %v357 = vsel %vm355, %v341, 0
        %359 = vmatpush.bf16.msra.mxu0 0
        %360 = vmatpush.bf16.msra.mxu0 0
        %361 = vmatpush.bf16.msra.mxu0 0
        %362 = vmatpush.bf16.msra.mxu0 0
        %363 = vmatpush.bf16.msra.mxu0 0
        %364 = vmatpush.bf16.msra.mxu0 0
        %365 = vmatpush.bf16.msra.mxu0 0
        %366 = vmatpush.bf16.msra.mxu0 %v357
        %367 = vmatmul.bf16.gmra.mxu0 %v344
        %v368 = vpop.f32.mrf.mxu0
        %v369 = vadd.f32 0.0, %v368
        %v370 = vpop.f32.mrf.mxu0
        %v371 = vadd.f32 0.0, %v370
        %372 = vmatmul.bf16.gmra.mxu0 %v347
        %v373 = vpop.f32.mrf.mxu0
        %v374 = vadd.f32 0.0, %v373
        %v375 = vpop.f32.mrf.mxu0
        %v376 = vadd.f32 0.0, %v375
        %377 = vmatmul.bf16.gmra.mxu0 %v350
        %v378 = vpop.f32.mrf.mxu0
        %v379 = vadd.f32 0.0, %v378
        %v380 = vpop.f32.mrf.mxu0
        %v381 = vadd.f32 0.0, %v380
        %382 = vmatmul.bf16.gmra.mxu0 %v353
        %v383 = vpop.f32.mrf.mxu0
        %v384 = vadd.f32 0.0, %v383
        %v385 = vpop.f32.mrf.mxu0
        %v386 = vadd.f32 0.0, %v385
        %387 = vdwg.mxu0
        %v389 = vunpack.c.l.b16 %v303
        %v390 = vpack.c.b16 %v325, %v389
        %v391 = vpack.c.b16 %v327, %v326
        %v392 = vpack.c.b16 %v329, %v328
        %v393 = vpack.c.b16 %v331, %v330
        %v396 = vunpack.c.l.b16 %v311
        %v397 = vunpack.c.l.b16 %v312
        %v398 = vpack.c.b16 %v397, %v396
        %v400 = vsel %vm342, %v390, 0
        %v403 = vsel %vm342, %v391, 0
        %v406 = vsel %vm342, %v392, 0
        %v409 = vsel %vm342, %v393, 0
        %v412 = vsel %vm355, %v398, 0
        %414 = vmatpush.bf16.msra.mxu0 0
        %415 = vmatpush.bf16.msra.mxu0 0
        %416 = vmatpush.bf16.msra.mxu0 0
        %417 = vmatpush.bf16.msra.mxu0 0
        %418 = vmatpush.bf16.msra.mxu0 0
        %419 = vmatpush.bf16.msra.mxu0 0
        %420 = vmatpush.bf16.msra.mxu0 0
        %421 = vmatpush.bf16.msra.mxu0 %v412
        %422 = vmatmul.bf16.gmra.mxu0 %v400
        %v423 = vpop.f32.mrf.mxu0
        %v424 = vadd.f32 %v369, %v423
        %v425 = vpop.f32.mrf.mxu0
        %v426 = vadd.f32 %v371, %v425
        %427 = vmatmul.bf16.gmra.mxu0 %v403
        %v428 = vpop.f32.mrf.mxu0
        %v429 = vadd.f32 %v374, %v428
        %v430 = vpop.f32.mrf.mxu0
        %v431 = vadd.f32 %v376, %v430
        %432 = vmatmul.bf16.gmra.mxu0 %v406
        %v433 = vpop.f32.mrf.mxu0
        %v434 = vadd.f32 %v379, %v433
        %v435 = vpop.f32.mrf.mxu0
        %v436 = vadd.f32 %v381, %v435
        %437 = vmatmul.bf16.gmra.mxu0 %v409
        %v438 = vpop.f32.mrf.mxu0
        %v439 = vadd.f32 %v384, %v438
        %v440 = vpop.f32.mrf.mxu0
        %v441 = vadd.f32 %v386, %v440
        %442 = vdwg.mxu0
        %v443 = vld [vmem:[%s302 + $0x8] sm:$0xf]
        %v444 = vld [vmem:[%s302 + $0xc] sm:$0xf]
        %v445 = vld [vmem:[%s302 + $0x10] sm:$0xf]
        %v446 = vld [vmem:[%s302 + $0x14] sm:$0xf]
        %v447 = vld [vmem:[%s302 + $0x18] sm:$0xf]
        %v448 = vld [vmem:[%s302 + $0x1c] sm:$0xf]
        %v449 = vld [vmem:[%s302 + $0x20] sm:$0xf]
        %v450 = vld [vmem:[%s302 + $0x24] sm:$0xf]
        %s451 = scalar_lea.vmem %s2, 16
        %v452 = vld [vmem:[%s451] sm:$0xf]
        %v453 = vld [vmem:[%s451 + $0x4] sm:$0x3]
        %v462 = vunpack.c.l.b16 %v443
        %v463 = vunpack.c.l.b16 %v444
        %v464 = vunpack.c.l.b16 %v445
        %v465 = vunpack.c.l.b16 %v446
        %v466 = vunpack.c.l.b16 %v447
        %v467 = vunpack.c.l.b16 %v448
        %v468 = vunpack.c.l.b16 %v449
        %v469 = vunpack.c.l.b16 %v450
        %v470 = vpack.c.b16 %v463, %v462
        %v471 = vpack.c.b16 %v465, %v464
        %v472 = vpack.c.b16 %v467, %v466
        %v473 = vpack.c.b16 %v469, %v468
        %v476 = vunpack.c.l.b16 %v452
        %v477 = vunpack.c.l.b16 %v453
        %v478 = vpack.c.b16 %v477, %v476
        %v480 = vsel %vm342, %v470, 0
        %v483 = vsel %vm342, %v471, 0
        %v486 = vsel %vm342, %v472, 0
        %v489 = vsel %vm342, %v473, 0
        %v492 = vsel %vm355, %v478, 0
        %494 = vmatpush.bf16.msra.mxu0 0
        %495 = vmatpush.bf16.msra.mxu0 0
        %496 = vmatpush.bf16.msra.mxu0 0
        %497 = vmatpush.bf16.msra.mxu0 0
        %498 = vmatpush.bf16.msra.mxu0 0
        %499 = vmatpush.bf16.msra.mxu0 0
        %500 = vmatpush.bf16.msra.mxu0 0
        %501 = vmatpush.bf16.msra.mxu0 %v492
        %502 = vmatmul.bf16.gmra.mxu0 %v480
        %v503 = vpop.f32.mrf.mxu0
        %v504 = vadd.f32 0.0, %v503
        %v505 = vpop.f32.mrf.mxu0
        %v506 = vadd.f32 0.0, %v505
        %507 = vmatmul.bf16.gmra.mxu0 %v483
        %v508 = vpop.f32.mrf.mxu0
        %v509 = vadd.f32 0.0, %v508
        %v510 = vpop.f32.mrf.mxu0
        %v511 = vadd.f32 0.0, %v510
        %512 = vmatmul.bf16.gmra.mxu0 %v486
        %v513 = vpop.f32.mrf.mxu0
        %v514 = vadd.f32 0.0, %v513
        %v515 = vpop.f32.mrf.mxu0
        %v516 = vadd.f32 0.0, %v515
        %517 = vmatmul.bf16.gmra.mxu0 %v489
        %v518 = vpop.f32.mrf.mxu0
        %v519 = vadd.f32 0.0, %v518
        %v520 = vpop.f32.mrf.mxu0
        %v521 = vadd.f32 0.0, %v520
        %522 = vdwg.mxu0
        %v523 = vadd.f32 %v424, %v504
        %v524 = vadd.f32 %v426, %v506
        %v525 = vadd.f32 %v429, %v509
        %v526 = vadd.f32 %v431, %v511
        %v527 = vadd.f32 %v434, %v514
        %v528 = vadd.f32 %v436, %v516
        %v529 = vadd.f32 %v439, %v519
        %v530 = vadd.f32 %v441, %v521
        %s531 = sadd.s32 %s295, 1
        %s532 = smul.u32 %s531, 10
        %s533 = smul.addr %s532, 4
        %s534 = scalar_lea.vmem %s260, %s533
        %v535 = vld [vmem:[%s534] sm:$0xf]
        %v536 = vld [vmem:[%s534 + $0x4] sm:$0xf]
        %v537 = vld [vmem:[%s534 + $0x8] sm:$0xf]
        %v538 = vld [vmem:[%s534 + $0xc] sm:$0xf]
        %v539 = vld [vmem:[%s534 + $0x10] sm:$0xf]
        %v540 = vld [vmem:[%s534 + $0x14] sm:$0xf]
        %v541 = vld [vmem:[%s534 + $0x18] sm:$0xf]
        %v542 = vld [vmem:[%s534 + $0x1c] sm:$0xf]
        %s543 = scalar_lea.vmem %s2, 24
        %v544 = vld [vmem:[%s543] sm:$0xf]
        %v545 = vld [vmem:[%s543 + $0x4] sm:$0x3]
        %v554 = vunpack.c.l.b16 %v535
        %v555 = vunpack.c.l.b16 %v536
        %v556 = vunpack.c.l.b16 %v537
        %v557 = vunpack.c.l.b16 %v538
        %v558 = vunpack.c.l.b16 %v539
        %v559 = vunpack.c.l.b16 %v540
        %v560 = vunpack.c.l.b16 %v541
        %v561 = vunpack.c.l.b16 %v542
        %v562 = vpack.c.b16 %v555, %v554
        %v563 = vpack.c.b16 %v557, %v556
        %v564 = vpack.c.b16 %v559, %v558
        %v565 = vpack.c.b16 %v561, %v560
        %v568 = vunpack.c.l.b16 %v544
        %v569 = vunpack.c.l.b16 %v545
        %v570 = vpack.c.b16 %v569, %v568
        %v572 = vsel %vm342, %v562, 0
        %v575 = vsel %vm342, %v563, 0
        %v578 = vsel %vm342, %v564, 0
        %v581 = vsel %vm342, %v565, 0
        %v584 = vsel %vm355, %v570, 0
        %586 = vmatpush.bf16.msra.mxu0 0
        %587 = vmatpush.bf16.msra.mxu0 0
        %588 = vmatpush.bf16.msra.mxu0 0
        %589 = vmatpush.bf16.msra.mxu0 0
        %590 = vmatpush.bf16.msra.mxu0 0
        %591 = vmatpush.bf16.msra.mxu0 0
        %592 = vmatpush.bf16.msra.mxu0 0
        %593 = vmatpush.bf16.msra.mxu0 %v584
        %594 = vmatmul.bf16.gmra.mxu0 %v572
        %v595 = vpop.f32.mrf.mxu0
        %v596 = vadd.f32 0.0, %v595
        %v597 = vpop.f32.mrf.mxu0
        %v598 = vadd.f32 0.0, %v597
        %599 = vmatmul.bf16.gmra.mxu0 %v575
        %v600 = vpop.f32.mrf.mxu0
        %v601 = vadd.f32 0.0, %v600
        %v602 = vpop.f32.mrf.mxu0
        %v603 = vadd.f32 0.0, %v602
        %604 = vmatmul.bf16.gmra.mxu0 %v578
        %v605 = vpop.f32.mrf.mxu0
        %v606 = vadd.f32 0.0, %v605
        %v607 = vpop.f32.mrf.mxu0
        %v608 = vadd.f32 0.0, %v607
        %609 = vmatmul.bf16.gmra.mxu0 %v581
        %v610 = vpop.f32.mrf.mxu0
        %v611 = vadd.f32 0.0, %v610
        %v612 = vpop.f32.mrf.mxu0
        %v613 = vadd.f32 0.0, %v612
        %614 = vdwg.mxu0
        %v615 = vadd.f32 %v523, %v596
        %v616 = vadd.f32 %v524, %v598
        %v617 = vadd.f32 %v525, %v601
        %v618 = vadd.f32 %v526, %v603
        %v619 = vadd.f32 %v527, %v606
        %v620 = vadd.f32 %v528, %v608
        %v621 = vadd.f32 %v529, %v611
        %v622 = vadd.f32 %v530, %v613
        %v623 = vld [vmem:[%s534 + $0x4] sm:$0xf]
        %v624 = vld [vmem:[%s534 + $0x8] sm:$0xf]
        %v625 = vld [vmem:[%s534 + $0xc] sm:$0xf]
        %v626 = vld [vmem:[%s534 + $0x10] sm:$0xf]
        %v627 = vld [vmem:[%s534 + $0x14] sm:$0xf]
        %v628 = vld [vmem:[%s534 + $0x18] sm:$0xf]
        %v629 = vld [vmem:[%s534 + $0x1c] sm:$0xf]
        %v630 = vld [vmem:[%s534 + $0x20] sm:$0xf]
        %s631 = scalar_lea.vmem %s2, 32
        %v632 = vld [vmem:[%s631] sm:$0xf]
        %v633 = vld [vmem:[%s631 + $0x4] sm:$0x3]
        %v642 = vunpack.c.l.b16 %v623
        %v643 = vunpack.c.l.b16 %v624
        %v644 = vunpack.c.l.b16 %v625
        %v645 = vunpack.c.l.b16 %v626
        %v646 = vunpack.c.l.b16 %v627
        %v647 = vunpack.c.l.b16 %v628
        %v648 = vunpack.c.l.b16 %v629
        %v649 = vunpack.c.l.b16 %v630
        %v650 = vpack.c.b16 %v643, %v642
        %v651 = vpack.c.b16 %v645, %v644
        %v652 = vpack.c.b16 %v647, %v646
        %v653 = vpack.c.b16 %v649, %v648
        %v656 = vunpack.c.l.b16 %v632
        %v657 = vunpack.c.l.b16 %v633
        %v658 = vpack.c.b16 %v657, %v656
        %v660 = vsel %vm342, %v650, 0
        %v663 = vsel %vm342, %v651, 0
        %v666 = vsel %vm342, %v652, 0
        %v669 = vsel %vm342, %v653, 0
        %v672 = vsel %vm355, %v658, 0
        %674 = vmatpush.bf16.msra.mxu0 0
        %675 = vmatpush.bf16.msra.mxu0 0
        %676 = vmatpush.bf16.msra.mxu0 0
        %677 = vmatpush.bf16.msra.mxu0 0
        %678 = vmatpush.bf16.msra.mxu0 0
        %679 = vmatpush.bf16.msra.mxu0 0
        %680 = vmatpush.bf16.msra.mxu0 0
        %681 = vmatpush.bf16.msra.mxu0 %v672
        %682 = vmatmul.bf16.gmra.mxu0 %v660
        %v683 = vpop.f32.mrf.mxu0
        %v684 = vadd.f32 0.0, %v683
        %v685 = vpop.f32.mrf.mxu0
        %v686 = vadd.f32 0.0, %v685
        %687 = vmatmul.bf16.gmra.mxu0 %v663
        %v688 = vpop.f32.mrf.mxu0
        %v689 = vadd.f32 0.0, %v688
        %v690 = vpop.f32.mrf.mxu0
        %v691 = vadd.f32 0.0, %v690
        %692 = vmatmul.bf16.gmra.mxu0 %v666
        %v693 = vpop.f32.mrf.mxu0
        %v694 = vadd.f32 0.0, %v693
        %v695 = vpop.f32.mrf.mxu0
        %v696 = vadd.f32 0.0, %v695
        %697 = vmatmul.bf16.gmra.mxu0 %v669
        %v698 = vpop.f32.mrf.mxu0
        %v699 = vadd.f32 0.0, %v698
        %v700 = vpop.f32.mrf.mxu0
        %v701 = vadd.f32 0.0, %v700
        %702 = vdwg.mxu0
        %v703 = vadd.f32 %v615, %v684
        %v704 = vadd.f32 %v616, %v686
        %v705 = vadd.f32 %v617, %v689
        %v706 = vadd.f32 %v618, %v691
        %v707 = vadd.f32 %v619, %v694
        %v708 = vadd.f32 %v620, %v696
        %v709 = vadd.f32 %v621, %v699
        %v710 = vadd.f32 %v622, %v701
        %v711 = vld [vmem:[%s534 + $0x8] sm:$0xf]
        %v712 = vld [vmem:[%s534 + $0xc] sm:$0xf]
        %v713 = vld [vmem:[%s534 + $0x10] sm:$0xf]
        %v714 = vld [vmem:[%s534 + $0x14] sm:$0xf]
        %v715 = vld [vmem:[%s534 + $0x18] sm:$0xf]
        %v716 = vld [vmem:[%s534 + $0x1c] sm:$0xf]
        %v717 = vld [vmem:[%s534 + $0x20] sm:$0xf]
        %v718 = vld [vmem:[%s534 + $0x24] sm:$0xf]
        %s719 = scalar_lea.vmem %s2, 40
        %v720 = vld [vmem:[%s719] sm:$0xf]
        %v721 = vld [vmem:[%s719 + $0x4] sm:$0x3]
        %v730 = vunpack.c.l.b16 %v711
        %v731 = vunpack.c.l.b16 %v712
        %v732 = vunpack.c.l.b16 %v713
        %v733 = vunpack.c.l.b16 %v714
        %v734 = vunpack.c.l.b16 %v715
        %v735 = vunpack.c.l.b16 %v716
        %v736 = vunpack.c.l.b16 %v717
        %v737 = vunpack.c.l.b16 %v718
        %v738 = vpack.c.b16 %v731, %v730
        %v739 = vpack.c.b16 %v733, %v732
        %v740 = vpack.c.b16 %v735, %v734
        %v741 = vpack.c.b16 %v737, %v736
        %v744 = vunpack.c.l.b16 %v720
        %v745 = vunpack.c.l.b16 %v721
        %v746 = vpack.c.b16 %v745, %v744
        %v748 = vsel %vm342, %v738, 0
        %v751 = vsel %vm342, %v739, 0
        %v754 = vsel %vm342, %v740, 0
        %v757 = vsel %vm342, %v741, 0
        %v760 = vsel %vm355, %v746, 0
        %762 = vmatpush.bf16.msra.mxu0 0
        %763 = vmatpush.bf16.msra.mxu0 0
        %764 = vmatpush.bf16.msra.mxu0 0
        %765 = vmatpush.bf16.msra.mxu0 0
        %766 = vmatpush.bf16.msra.mxu0 0
        %767 = vmatpush.bf16.msra.mxu0 0
        %768 = vmatpush.bf16.msra.mxu0 0
        %769 = vmatpush.bf16.msra.mxu0 %v760
        %770 = vmatmul.bf16.gmra.mxu0 %v748
        %v771 = vpop.f32.mrf.mxu0
        %v772 = vadd.f32 0.0, %v771
        %v773 = vpop.f32.mrf.mxu0
        %v774 = vadd.f32 0.0, %v773
        %775 = vmatmul.bf16.gmra.mxu0 %v751
        %v776 = vpop.f32.mrf.mxu0
        %v777 = vadd.f32 0.0, %v776
        %v778 = vpop.f32.mrf.mxu0
        %v779 = vadd.f32 0.0, %v778
        %780 = vmatmul.bf16.gmra.mxu0 %v754
        %v781 = vpop.f32.mrf.mxu0
        %v782 = vadd.f32 0.0, %v781
        %v783 = vpop.f32.mrf.mxu0
        %v784 = vadd.f32 0.0, %v783
        %785 = vmatmul.bf16.gmra.mxu0 %v757
        %v786 = vpop.f32.mrf.mxu0
        %v787 = vadd.f32 0.0, %v786
        %v788 = vpop.f32.mrf.mxu0
        %v789 = vadd.f32 0.0, %v788
        %790 = vdwg.mxu0
        %v791 = vadd.f32 %v703, %v772
        %v792 = vadd.f32 %v704, %v774
        %v793 = vadd.f32 %v705, %v777
        %v794 = vadd.f32 %v706, %v779
        %v795 = vadd.f32 %v707, %v782
        %v796 = vadd.f32 %v708, %v784
        %v797 = vadd.f32 %v709, %v787
        %v798 = vadd.f32 %v710, %v789
        %s799 = sadd.s32 %s295, 2
        %s800 = smul.u32 %s799, 10
        %s801 = smul.addr %s800, 4
        %s802 = scalar_lea.vmem %s260, %s801
        %v803 = vld [vmem:[%s802] sm:$0xf]
        %v804 = vld [vmem:[%s802 + $0x4] sm:$0xf]
        %v805 = vld [vmem:[%s802 + $0x8] sm:$0xf]
        %v806 = vld [vmem:[%s802 + $0xc] sm:$0xf]
        %v807 = vld [vmem:[%s802 + $0x10] sm:$0xf]
        %v808 = vld [vmem:[%s802 + $0x14] sm:$0xf]
        %v809 = vld [vmem:[%s802 + $0x18] sm:$0xf]
        %v810 = vld [vmem:[%s802 + $0x1c] sm:$0xf]
        %s811 = scalar_lea.vmem %s2, 48
        %v812 = vld [vmem:[%s811] sm:$0xf]
        %v813 = vld [vmem:[%s811 + $0x4] sm:$0x3]
        %v822 = vunpack.c.l.b16 %v803
        %v823 = vunpack.c.l.b16 %v804
        %v824 = vunpack.c.l.b16 %v805
        %v825 = vunpack.c.l.b16 %v806
        %v826 = vunpack.c.l.b16 %v807
        %v827 = vunpack.c.l.b16 %v808
        %v828 = vunpack.c.l.b16 %v809
        %v829 = vunpack.c.l.b16 %v810
        %v830 = vpack.c.b16 %v823, %v822
        %v831 = vpack.c.b16 %v825, %v824
        %v832 = vpack.c.b16 %v827, %v826
        %v833 = vpack.c.b16 %v829, %v828
        %v836 = vunpack.c.l.b16 %v812
        %v837 = vunpack.c.l.b16 %v813
        %v838 = vpack.c.b16 %v837, %v836
        %v840 = vsel %vm342, %v830, 0
        %v843 = vsel %vm342, %v831, 0
        %v846 = vsel %vm342, %v832, 0
        %v849 = vsel %vm342, %v833, 0
        %v852 = vsel %vm355, %v838, 0
        %854 = vmatpush.bf16.msra.mxu0 0
        %855 = vmatpush.bf16.msra.mxu0 0
        %856 = vmatpush.bf16.msra.mxu0 0
        %857 = vmatpush.bf16.msra.mxu0 0
        %858 = vmatpush.bf16.msra.mxu0 0
        %859 = vmatpush.bf16.msra.mxu0 0
        %860 = vmatpush.bf16.msra.mxu0 0
        %861 = vmatpush.bf16.msra.mxu0 %v852
        %862 = vmatmul.bf16.gmra.mxu0 %v840
        %v863 = vpop.f32.mrf.mxu0
        %v864 = vadd.f32 0.0, %v863
        %v865 = vpop.f32.mrf.mxu0
        %v866 = vadd.f32 0.0, %v865
        %867 = vmatmul.bf16.gmra.mxu0 %v843
        %v868 = vpop.f32.mrf.mxu0
        %v869 = vadd.f32 0.0, %v868
        %v870 = vpop.f32.mrf.mxu0
        %v871 = vadd.f32 0.0, %v870
        %872 = vmatmul.bf16.gmra.mxu0 %v846
        %v873 = vpop.f32.mrf.mxu0
        %v874 = vadd.f32 0.0, %v873
        %v875 = vpop.f32.mrf.mxu0
        %v876 = vadd.f32 0.0, %v875
        %877 = vmatmul.bf16.gmra.mxu0 %v849
        %v878 = vpop.f32.mrf.mxu0
        %v879 = vadd.f32 0.0, %v878
        %v880 = vpop.f32.mrf.mxu0
        %v881 = vadd.f32 0.0, %v880
        %882 = vdwg.mxu0
        %v883 = vadd.f32 %v791, %v864
        %v884 = vadd.f32 %v792, %v866
        %v885 = vadd.f32 %v793, %v869
        %v886 = vadd.f32 %v794, %v871
        %v887 = vadd.f32 %v795, %v874
        %v888 = vadd.f32 %v796, %v876
        %v889 = vadd.f32 %v797, %v879
        %v890 = vadd.f32 %v798, %v881
        %v891 = vld [vmem:[%s802 + $0x4] sm:$0xf]
        %v892 = vld [vmem:[%s802 + $0x8] sm:$0xf]
        %v893 = vld [vmem:[%s802 + $0xc] sm:$0xf]
        %v894 = vld [vmem:[%s802 + $0x10] sm:$0xf]
        %v895 = vld [vmem:[%s802 + $0x14] sm:$0xf]
        %v896 = vld [vmem:[%s802 + $0x18] sm:$0xf]
        %v897 = vld [vmem:[%s802 + $0x1c] sm:$0xf]
        %v898 = vld [vmem:[%s802 + $0x20] sm:$0xf]
        %s899 = scalar_lea.vmem %s2, 56
        %v900 = vld [vmem:[%s899] sm:$0xf]
        %v901 = vld [vmem:[%s899 + $0x4] sm:$0x3]
        %v910 = vunpack.c.l.b16 %v891
        %v911 = vunpack.c.l.b16 %v892
        %v912 = vunpack.c.l.b16 %v893
        %v913 = vunpack.c.l.b16 %v894
        %v914 = vunpack.c.l.b16 %v895
        %v915 = vunpack.c.l.b16 %v896
        %v916 = vunpack.c.l.b16 %v897
        %v917 = vunpack.c.l.b16 %v898
        %v918 = vpack.c.b16 %v911, %v910
        %v919 = vpack.c.b16 %v913, %v912
        %v920 = vpack.c.b16 %v915, %v914
        %v921 = vpack.c.b16 %v917, %v916
        %v924 = vunpack.c.l.b16 %v900
        %v925 = vunpack.c.l.b16 %v901
        %v926 = vpack.c.b16 %v925, %v924
        %v928 = vsel %vm342, %v918, 0
        %v931 = vsel %vm342, %v919, 0
        %v934 = vsel %vm342, %v920, 0
        %v937 = vsel %vm342, %v921, 0
        %v940 = vsel %vm355, %v926, 0
        %942 = vmatpush.bf16.msra.mxu0 0
        %943 = vmatpush.bf16.msra.mxu0 0
        %944 = vmatpush.bf16.msra.mxu0 0
        %945 = vmatpush.bf16.msra.mxu0 0
        %946 = vmatpush.bf16.msra.mxu0 0
        %947 = vmatpush.bf16.msra.mxu0 0
        %948 = vmatpush.bf16.msra.mxu0 0
        %949 = vmatpush.bf16.msra.mxu0 %v940
        %950 = vmatmul.bf16.gmra.mxu0 %v928
        %v951 = vpop.f32.mrf.mxu0
        %v952 = vadd.f32 0.0, %v951
        %v953 = vpop.f32.mrf.mxu0
        %v954 = vadd.f32 0.0, %v953
        %955 = vmatmul.bf16.gmra.mxu0 %v931
        %v956 = vpop.f32.mrf.mxu0
        %v957 = vadd.f32 0.0, %v956
        %v958 = vpop.f32.mrf.mxu0
        %v959 = vadd.f32 0.0, %v958
        %960 = vmatmul.bf16.gmra.mxu0 %v934
        %v961 = vpop.f32.mrf.mxu0
        %v962 = vadd.f32 0.0, %v961
        %v963 = vpop.f32.mrf.mxu0
        %v964 = vadd.f32 0.0, %v963
        %965 = vmatmul.bf16.gmra.mxu0 %v937
        %v966 = vpop.f32.mrf.mxu0
        %v967 = vadd.f32 0.0, %v966
        %v968 = vpop.f32.mrf.mxu0
        %v969 = vadd.f32 0.0, %v968
        %970 = vdwg.mxu0
        %v971 = vadd.f32 %v883, %v952
        %v972 = vadd.f32 %v884, %v954
        %v973 = vadd.f32 %v885, %v957
        %v974 = vadd.f32 %v886, %v959
        %v975 = vadd.f32 %v887, %v962
        %v976 = vadd.f32 %v888, %v964
        %v977 = vadd.f32 %v889, %v967
        %v978 = vadd.f32 %v890, %v969
        %v979 = vld [vmem:[%s802 + $0x8] sm:$0xf]
        %v980 = vld [vmem:[%s802 + $0xc] sm:$0xf]
        %v981 = vld [vmem:[%s802 + $0x10] sm:$0xf]
        %v982 = vld [vmem:[%s802 + $0x14] sm:$0xf]
        %v983 = vld [vmem:[%s802 + $0x18] sm:$0xf]
        %v984 = vld [vmem:[%s802 + $0x1c] sm:$0xf]
        %v985 = vld [vmem:[%s802 + $0x20] sm:$0xf]
        %v986 = vld [vmem:[%s802 + $0x24] sm:$0xf]
        %s987 = scalar_lea.vmem %s2, 64
        %v988 = vld [vmem:[%s987] sm:$0xf]
        %v989 = vld [vmem:[%s987 + $0x4] sm:$0x3]
        %v998 = vunpack.c.l.b16 %v979
        %v999 = vunpack.c.l.b16 %v980
        %v1000 = vunpack.c.l.b16 %v981
        %v1001 = vunpack.c.l.b16 %v982
        %v1002 = vunpack.c.l.b16 %v983
        %v1003 = vunpack.c.l.b16 %v984
        %v1004 = vunpack.c.l.b16 %v985
        %v1005 = vunpack.c.l.b16 %v986
        %v1006 = vpack.c.b16 %v999, %v998
        %v1007 = vpack.c.b16 %v1001, %v1000
        %v1008 = vpack.c.b16 %v1003, %v1002
        %v1009 = vpack.c.b16 %v1005, %v1004
        %v1012 = vunpack.c.l.b16 %v988
        %v1013 = vunpack.c.l.b16 %v989
        %v1014 = vpack.c.b16 %v1013, %v1012
        %v1016 = vsel %vm342, %v1006, 0
        %v1019 = vsel %vm342, %v1007, 0
        %v1022 = vsel %vm342, %v1008, 0
        %v1025 = vsel %vm342, %v1009, 0
        %v1028 = vsel %vm355, %v1014, 0
        %1030 = vmatpush.bf16.msra.mxu0 0
        %1031 = vmatpush.bf16.msra.mxu0 0
        %1032 = vmatpush.bf16.msra.mxu0 0
        %1033 = vmatpush.bf16.msra.mxu0 0
        %1034 = vmatpush.bf16.msra.mxu0 0
        %1035 = vmatpush.bf16.msra.mxu0 0
        %1036 = vmatpush.bf16.msra.mxu0 0
        %1037 = vmatpush.bf16.msra.mxu0 %v1028
        %1038 = vmatmul.bf16.gmra.mxu0 %v1016
        %v1039 = vpop.f32.mrf.mxu0
        %v1040 = vadd.f32 0.0, %v1039
        %v1041 = vpop.f32.mrf.mxu0
        %v1042 = vadd.f32 0.0, %v1041
        %1043 = vmatmul.bf16.gmra.mxu0 %v1019
        %v1044 = vpop.f32.mrf.mxu0
        %v1045 = vadd.f32 0.0, %v1044
        %v1046 = vpop.f32.mrf.mxu0
        %v1047 = vadd.f32 0.0, %v1046
        %1048 = vmatmul.bf16.gmra.mxu0 %v1022
        %v1049 = vpop.f32.mrf.mxu0
        %v1050 = vadd.f32 0.0, %v1049
        %v1051 = vpop.f32.mrf.mxu0
        %v1052 = vadd.f32 0.0, %v1051
        %1053 = vmatmul.bf16.gmra.mxu0 %v1025
        %v1054 = vpop.f32.mrf.mxu0
        %v1055 = vadd.f32 0.0, %v1054
        %v1056 = vpop.f32.mrf.mxu0
        %v1057 = vadd.f32 0.0, %v1056
        %1058 = vdwg.mxu0
        %v1059 = vadd.f32 %v971, %v1040
        %v1060 = vadd.f32 %v972, %v1042
        %v1061 = vadd.f32 %v973, %v1045
        %v1062 = vadd.f32 %v974, %v1047
        %v1063 = vadd.f32 %v975, %v1050
        %v1064 = vadd.f32 %v976, %v1052
        %v1065 = vadd.f32 %v977, %v1055
        %v1066 = vadd.f32 %v978, %v1057
        %s1067 = smul.u32 %s295, 64
        %s1068 = scalar_lea.vmem %s291, %s1067
        %1069 = vst [vmem:[%s1068] sm:$0xff] %v1059
        %1070 = vst [vmem:[%s1068 + $0x8] sm:$0xff] %v1060
        %1071 = vst [vmem:[%s1068 + $0x10] sm:$0xff] %v1061
        %1072 = vst [vmem:[%s1068 + $0x18] sm:$0xff] %v1062
        %1073 = vst [vmem:[%s1068 + $0x20] sm:$0xff] %v1063
        %1074 = vst [vmem:[%s1068 + $0x28] sm:$0xff] %v1064
        %1075 = vst [vmem:[%s1068 + $0x30] sm:$0xff] %v1065
        %1076 = vst [vmem:[%s1068 + $0x38] sm:$0xff] %v1066
      $region37: #{cdc_t_forward.1} parent=31 // loop_footer
        %s299 = sadd.s32 1, %s295
      $region38: #{cdc_t_forward.1} parent=31 // loop_footer_branch
        %294 = sbr.rel target = $region34
      $region39: #{cdc_t_forward.1} parent=31 // loop_exit
        _
      %s1077 = scalar_lea.vmem %s260, 240
      %v1078 = vld [vmem:[%s1077] sm:$0xf]
      %v1079 = vld [vmem:[%s1077 + $0x4] sm:$0xf]
      %v1080 = vld [vmem:[%s1077 + $0x8] sm:$0xf]
      %v1081 = vld [vmem:[%s1077 + $0xc] sm:$0xf]
      %v1082 = vld [vmem:[%s1077 + $0x10] sm:$0xf]
      %v1083 = vld [vmem:[%s1077 + $0x14] sm:$0xf]
      %v1084 = vld [vmem:[%s1077 + $0x18] sm:$0xf]
      %v1085 = vld [vmem:[%s1077 + $0x1c] sm:$0xf]
      %v1086 = vld [vmem:[%s2] sm:$0xf]
      %v1087 = vld [vmem:[%s2 + $0x4] sm:$0x3]
      %v1088 = vld [vmem:[%s1077 + $0x20] sm:$0xf]
      %s1089 = scalar_lea.vmem %s2, 8
      %v1090 = vld [vmem:[%s1089] sm:$0xf]
      %v1091 = vld [vmem:[%s1089 + $0x4] sm:$0x3]
      %v1100 = vunpack.c.l.b16 %v1079
      %v1101 = vunpack.c.l.b16 %v1080
      %v1102 = vunpack.c.l.b16 %v1081
      %v1103 = vunpack.c.l.b16 %v1082
      %v1104 = vunpack.c.l.b16 %v1083
      %v1105 = vunpack.c.l.b16 %v1084
      %v1106 = vunpack.c.l.b16 %v1085
      %v1107 = vunpack.c.l.b16 %v1088
      %v1108 = vpack.c.b16 %v1101, %v1100
      %v1109 = vpack.c.b16 %v1103, %v1102
      %v1110 = vpack.c.b16 %v1105, %v1104
      %v1111 = vpack.c.b16 %v1107, %v1106
      %v1114 = vunpack.c.l.b16 %v1090
      %v1115 = vunpack.c.l.b16 %v1091
      %v1116 = vpack.c.b16 %v1115, %v1114
      %vm1117 = vcmask 97280
      %v1119 = vsel %vm1117, %v1108, 0
      %v1122 = vsel %vm1117, %v1109, 0
      %v1125 = vsel %vm1117, %v1110, 0
      %v1128 = vsel %vm1117, %v1111, 0
      %vm1130 = vcmask 1045504
      %v1132 = vsel %vm1130, %v1116, 0
      %1134 = vmatpush.bf16.msra.mxu0 0
      %1135 = vmatpush.bf16.msra.mxu0 0
      %1136 = vmatpush.bf16.msra.mxu0 0
      %1137 = vmatpush.bf16.msra.mxu0 0
      %1138 = vmatpush.bf16.msra.mxu0 0
      %1139 = vmatpush.bf16.msra.mxu0 0
      %1140 = vmatpush.bf16.msra.mxu0 0
      %1141 = vmatpush.bf16.msra.mxu0 %v1132
      %1142 = vmatmul.bf16.gmra.mxu0 %v1119
      %v1143 = vpop.f32.mrf.mxu0
      %v1144 = vadd.f32 0.0, %v1143
      %v1145 = vpop.f32.mrf.mxu0
      %v1146 = vadd.f32 0.0, %v1145
      %1147 = vmatmul.bf16.gmra.mxu0 %v1122
      %v1148 = vpop.f32.mrf.mxu0
      %v1149 = vadd.f32 0.0, %v1148
      %v1150 = vpop.f32.mrf.mxu0
      %v1151 = vadd.f32 0.0, %v1150
      %1152 = vmatmul.bf16.gmra.mxu0 %v1125
      %v1153 = vpop.f32.mrf.mxu0
      %v1154 = vadd.f32 0.0, %v1153
      %v1155 = vpop.f32.mrf.mxu0
      %v1156 = vadd.f32 0.0, %v1155
      %1157 = vmatmul.bf16.gmra.mxu0 %v1128
      %v1158 = vpop.f32.mrf.mxu0
      %v1159 = vadd.f32 0.0, %v1158
      %v1160 = vpop.f32.mrf.mxu0
      %v1161 = vadd.f32 0.0, %v1160
      %1162 = vdwg.mxu0
      %v1164 = vunpack.c.l.b16 %v1078
      %v1165 = vpack.c.b16 %v1100, %v1164
      %v1166 = vpack.c.b16 %v1102, %v1101
      %v1167 = vpack.c.b16 %v1104, %v1103
      %v1168 = vpack.c.b16 %v1106, %v1105
      %v1171 = vunpack.c.l.b16 %v1086
      %v1172 = vunpack.c.l.b16 %v1087
      %v1173 = vpack.c.b16 %v1172, %v1171
      %v1175 = vsel %vm1117, %v1165, 0
      %v1178 = vsel %vm1117, %v1166, 0
      %v1181 = vsel %vm1117, %v1167, 0
      %v1184 = vsel %vm1117, %v1168, 0
      %v1187 = vsel %vm1130, %v1173, 0
      %1189 = vmatpush.bf16.msra.mxu0 0
      %1190 = vmatpush.bf16.msra.mxu0 0
      %1191 = vmatpush.bf16.msra.mxu0 0
      %1192 = vmatpush.bf16.msra.mxu0 0
      %1193 = vmatpush.bf16.msra.mxu0 0
      %1194 = vmatpush.bf16.msra.mxu0 0
      %1195 = vmatpush.bf16.msra.mxu0 0
      %1196 = vmatpush.bf16.msra.mxu0 %v1187
      %1197 = vmatmul.bf16.gmra.mxu0 %v1175
      %v1198 = vpop.f32.mrf.mxu0
      %v1199 = vadd.f32 %v1144, %v1198
      %v1200 = vpop.f32.mrf.mxu0
      %v1201 = vadd.f32 %v1146, %v1200
      %1202 = vmatmul.bf16.gmra.mxu0 %v1178
      %v1203 = vpop.f32.mrf.mxu0
      %v1204 = vadd.f32 %v1149, %v1203
      %v1205 = vpop.f32.mrf.mxu0
      %v1206 = vadd.f32 %v1151, %v1205
      %1207 = vmatmul.bf16.gmra.mxu0 %v1181
      %v1208 = vpop.f32.mrf.mxu0
      %v1209 = vadd.f32 %v1154, %v1208
      %v1210 = vpop.f32.mrf.mxu0
      %v1211 = vadd.f32 %v1156, %v1210
      %1212 = vmatmul.bf16.gmra.mxu0 %v1184
      %v1213 = vpop.f32.mrf.mxu0
      %v1214 = vadd.f32 %v1159, %v1213
      %v1215 = vpop.f32.mrf.mxu0
      %v1216 = vadd.f32 %v1161, %v1215
      %1217 = vdwg.mxu0
      %v1218 = vld [vmem:[%s1077 + $0x8] sm:$0xf]
      %v1219 = vld [vmem:[%s1077 + $0xc] sm:$0xf]
      %v1220 = vld [vmem:[%s1077 + $0x10] sm:$0xf]
      %v1221 = vld [vmem:[%s1077 + $0x14] sm:$0xf]
      %v1222 = vld [vmem:[%s1077 + $0x18] sm:$0xf]
      %v1223 = vld [vmem:[%s1077 + $0x1c] sm:$0xf]
      %v1224 = vld [vmem:[%s1077 + $0x20] sm:$0xf]
      %v1225 = vld [vmem:[%s1077 + $0x24] sm:$0xf]
      %s1226 = scalar_lea.vmem %s2, 16
      %v1227 = vld [vmem:[%s1226] sm:$0xf]
      %v1228 = vld [vmem:[%s1226 + $0x4] sm:$0x3]
      %v1237 = vunpack.c.l.b16 %v1218
      %v1238 = vunpack.c.l.b16 %v1219
      %v1239 = vunpack.c.l.b16 %v1220
      %v1240 = vunpack.c.l.b16 %v1221
      %v1241 = vunpack.c.l.b16 %v1222
      %v1242 = vunpack.c.l.b16 %v1223
      %v1243 = vunpack.c.l.b16 %v1224
      %v1244 = vunpack.c.l.b16 %v1225
      %v1245 = vpack.c.b16 %v1238, %v1237
      %v1246 = vpack.c.b16 %v1240, %v1239
      %v1247 = vpack.c.b16 %v1242, %v1241
      %v1248 = vpack.c.b16 %v1244, %v1243
      %v1251 = vunpack.c.l.b16 %v1227
      %v1252 = vunpack.c.l.b16 %v1228
      %v1253 = vpack.c.b16 %v1252, %v1251
      %v1255 = vsel %vm1117, %v1245, 0
      %v1258 = vsel %vm1117, %v1246, 0
      %v1261 = vsel %vm1117, %v1247, 0
      %v1264 = vsel %vm1117, %v1248, 0
      %v1267 = vsel %vm1130, %v1253, 0
      %1269 = vmatpush.bf16.msra.mxu0 0
      %1270 = vmatpush.bf16.msra.mxu0 0
      %1271 = vmatpush.bf16.msra.mxu0 0
      %1272 = vmatpush.bf16.msra.mxu0 0
      %1273 = vmatpush.bf16.msra.mxu0 0
      %1274 = vmatpush.bf16.msra.mxu0 0
      %1275 = vmatpush.bf16.msra.mxu0 0
      %1276 = vmatpush.bf16.msra.mxu0 %v1267
      %1277 = vmatmul.bf16.gmra.mxu0 %v1255
      %v1278 = vpop.f32.mrf.mxu0
      %v1279 = vadd.f32 0.0, %v1278
      %v1280 = vpop.f32.mrf.mxu0
      %v1281 = vadd.f32 0.0, %v1280
      %1282 = vmatmul.bf16.gmra.mxu0 %v1258
      %v1283 = vpop.f32.mrf.mxu0
      %v1284 = vadd.f32 0.0, %v1283
      %v1285 = vpop.f32.mrf.mxu0
      %v1286 = vadd.f32 0.0, %v1285
      %1287 = vmatmul.bf16.gmra.mxu0 %v1261
      %v1288 = vpop.f32.mrf.mxu0
      %v1289 = vadd.f32 0.0, %v1288
      %v1290 = vpop.f32.mrf.mxu0
      %v1291 = vadd.f32 0.0, %v1290
      %1292 = vmatmul.bf16.gmra.mxu0 %v1264
      %v1293 = vpop.f32.mrf.mxu0
      %v1294 = vadd.f32 0.0, %v1293
      %v1295 = vpop.f32.mrf.mxu0
      %v1296 = vadd.f32 0.0, %v1295
      %1297 = vdwg.mxu0
      %v1298 = vadd.f32 %v1199, %v1279
      %v1299 = vadd.f32 %v1201, %v1281
      %v1300 = vadd.f32 %v1204, %v1284
      %v1301 = vadd.f32 %v1206, %v1286
      %v1302 = vadd.f32 %v1209, %v1289
      %v1303 = vadd.f32 %v1211, %v1291
      %v1304 = vadd.f32 %v1214, %v1294
      %v1305 = vadd.f32 %v1216, %v1296
      %s1306 = scalar_lea.vmem %s260, 280
      %v1307 = vld [vmem:[%s1306] sm:$0xf]
      %v1308 = vld [vmem:[%s1306 + $0x4] sm:$0xf]
      %v1309 = vld [vmem:[%s1306 + $0x8] sm:$0xf]
      %v1310 = vld [vmem:[%s1306 + $0xc] sm:$0xf]
      %v1311 = vld [vmem:[%s1306 + $0x10] sm:$0xf]
      %v1312 = vld [vmem:[%s1306 + $0x14] sm:$0xf]
      %v1313 = vld [vmem:[%s1306 + $0x18] sm:$0xf]
      %v1314 = vld [vmem:[%s1306 + $0x1c] sm:$0xf]
      %s1315 = scalar_lea.vmem %s2, 24
      %v1316 = vld [vmem:[%s1315] sm:$0xf]
      %v1317 = vld [vmem:[%s1315 + $0x4] sm:$0x3]
      %v1326 = vunpack.c.l.b16 %v1307
      %v1327 = vunpack.c.l.b16 %v1308
      %v1328 = vunpack.c.l.b16 %v1309
      %v1329 = vunpack.c.l.b16 %v1310
      %v1330 = vunpack.c.l.b16 %v1311
      %v1331 = vunpack.c.l.b16 %v1312
      %v1332 = vunpack.c.l.b16 %v1313
      %v1333 = vunpack.c.l.b16 %v1314
      %v1334 = vpack.c.b16 %v1327, %v1326
      %v1335 = vpack.c.b16 %v1329, %v1328
      %v1336 = vpack.c.b16 %v1331, %v1330
      %v1337 = vpack.c.b16 %v1333, %v1332
      %v1340 = vunpack.c.l.b16 %v1316
      %v1341 = vunpack.c.l.b16 %v1317
      %v1342 = vpack.c.b16 %v1341, %v1340
      %v1344 = vsel %vm1117, %v1334, 0
      %v1347 = vsel %vm1117, %v1335, 0
      %v1350 = vsel %vm1117, %v1336, 0
      %v1353 = vsel %vm1117, %v1337, 0
      %v1356 = vsel %vm1130, %v1342, 0
      %1358 = vmatpush.bf16.msra.mxu0 0
      %1359 = vmatpush.bf16.msra.mxu0 0
      %1360 = vmatpush.bf16.msra.mxu0 0
      %1361 = vmatpush.bf16.msra.mxu0 0
      %1362 = vmatpush.bf16.msra.mxu0 0
      %1363 = vmatpush.bf16.msra.mxu0 0
      %1364 = vmatpush.bf16.msra.mxu0 0
      %1365 = vmatpush.bf16.msra.mxu0 %v1356
      %1366 = vmatmul.bf16.gmra.mxu0 %v1344
      %v1367 = vpop.f32.mrf.mxu0
      %v1368 = vadd.f32 0.0, %v1367
      %v1369 = vpop.f32.mrf.mxu0
      %v1370 = vadd.f32 0.0, %v1369
      %1371 = vmatmul.bf16.gmra.mxu0 %v1347
      %v1372 = vpop.f32.mrf.mxu0
      %v1373 = vadd.f32 0.0, %v1372
      %v1374 = vpop.f32.mrf.mxu0
      %v1375 = vadd.f32 0.0, %v1374
      %1376 = vmatmul.bf16.gmra.mxu0 %v1350
      %v1377 = vpop.f32.mrf.mxu0
      %v1378 = vadd.f32 0.0, %v1377
      %v1379 = vpop.f32.mrf.mxu0
      %v1380 = vadd.f32 0.0, %v1379
      %1381 = vmatmul.bf16.gmra.mxu0 %v1353
      %v1382 = vpop.f32.mrf.mxu0
      %v1383 = vadd.f32 0.0, %v1382
      %v1384 = vpop.f32.mrf.mxu0
      %v1385 = vadd.f32 0.0, %v1384
      %1386 = vdwg.mxu0
      %v1387 = vadd.f32 %v1298, %v1368
      %v1388 = vadd.f32 %v1299, %v1370
      %v1389 = vadd.f32 %v1300, %v1373
      %v1390 = vadd.f32 %v1301, %v1375
      %v1391 = vadd.f32 %v1302, %v1378
      %v1392 = vadd.f32 %v1303, %v1380
      %v1393 = vadd.f32 %v1304, %v1383
      %v1394 = vadd.f32 %v1305, %v1385
      %v1395 = vld [vmem:[%s1306 + $0x4] sm:$0xf]
      %v1396 = vld [vmem:[%s1306 + $0x8] sm:$0xf]
      %v1397 = vld [vmem:[%s1306 + $0xc] sm:$0xf]
      %v1398 = vld [vmem:[%s1306 + $0x10] sm:$0xf]
      %v1399 = vld [vmem:[%s1306 + $0x14] sm:$0xf]
      %v1400 = vld [vmem:[%s1306 + $0x18] sm:$0xf]
      %v1401 = vld [vmem:[%s1306 + $0x1c] sm:$0xf]
      %v1402 = vld [vmem:[%s1306 + $0x20] sm:$0xf]
      %s1403 = scalar_lea.vmem %s2, 32
      %v1404 = vld [vmem:[%s1403] sm:$0xf]
      %v1405 = vld [vmem:[%s1403 + $0x4] sm:$0x3]
      %v1414 = vunpack.c.l.b16 %v1395
      %v1415 = vunpack.c.l.b16 %v1396
      %v1416 = vunpack.c.l.b16 %v1397
      %v1417 = vunpack.c.l.b16 %v1398
      %v1418 = vunpack.c.l.b16 %v1399
      %v1419 = vunpack.c.l.b16 %v1400
      %v1420 = vunpack.c.l.b16 %v1401
      %v1421 = vunpack.c.l.b16 %v1402
      %v1422 = vpack.c.b16 %v1415, %v1414
      %v1423 = vpack.c.b16 %v1417, %v1416
      %v1424 = vpack.c.b16 %v1419, %v1418
      %v1425 = vpack.c.b16 %v1421, %v1420
      %v1428 = vunpack.c.l.b16 %v1404
      %v1429 = vunpack.c.l.b16 %v1405
      %v1430 = vpack.c.b16 %v1429, %v1428
      %v1432 = vsel %vm1117, %v1422, 0
      %v1435 = vsel %vm1117, %v1423, 0
      %v1438 = vsel %vm1117, %v1424, 0
      %v1441 = vsel %vm1117, %v1425, 0
      %v1444 = vsel %vm1130, %v1430, 0
      %1446 = vmatpush.bf16.msra.mxu0 0
      %1447 = vmatpush.bf16.msra.mxu0 0
      %1448 = vmatpush.bf16.msra.mxu0 0
      %1449 = vmatpush.bf16.msra.mxu0 0
      %1450 = vmatpush.bf16.msra.mxu0 0
      %1451 = vmatpush.bf16.msra.mxu0 0
      %1452 = vmatpush.bf16.msra.mxu0 0
      %1453 = vmatpush.bf16.msra.mxu0 %v1444
      %1454 = vmatmul.bf16.gmra.mxu0 %v1432
      %v1455 = vpop.f32.mrf.mxu0
      %v1456 = vadd.f32 0.0, %v1455
      %v1457 = vpop.f32.mrf.mxu0
      %v1458 = vadd.f32 0.0, %v1457
      %1459 = vmatmul.bf16.gmra.mxu0 %v1435
      %v1460 = vpop.f32.mrf.mxu0
      %v1461 = vadd.f32 0.0, %v1460
      %v1462 = vpop.f32.mrf.mxu0
      %v1463 = vadd.f32 0.0, %v1462
      %1464 = vmatmul.bf16.gmra.mxu0 %v1438
      %v1465 = vpop.f32.mrf.mxu0
      %v1466 = vadd.f32 0.0, %v1465
      %v1467 = vpop.f32.mrf.mxu0
      %v1468 = vadd.f32 0.0, %v1467
      %1469 = vmatmul.bf16.gmra.mxu0 %v1441
      %v1470 = vpop.f32.mrf.mxu0
      %v1471 = vadd.f32 0.0, %v1470
      %v1472 = vpop.f32.mrf.mxu0
      %v1473 = vadd.f32 0.0, %v1472
      %1474 = vdwg.mxu0
      %v1475 = vadd.f32 %v1387, %v1456
      %v1476 = vadd.f32 %v1388, %v1458
      %v1477 = vadd.f32 %v1389, %v1461
      %v1478 = vadd.f32 %v1390, %v1463
      %v1479 = vadd.f32 %v1391, %v1466
      %v1480 = vadd.f32 %v1392, %v1468
      %v1481 = vadd.f32 %v1393, %v1471
      %v1482 = vadd.f32 %v1394, %v1473
      %v1483 = vld [vmem:[%s1306 + $0x8] sm:$0xf]
      %v1484 = vld [vmem:[%s1306 + $0xc] sm:$0xf]
      %v1485 = vld [vmem:[%s1306 + $0x10] sm:$0xf]
      %v1486 = vld [vmem:[%s1306 + $0x14] sm:$0xf]
      %v1487 = vld [vmem:[%s1306 + $0x18] sm:$0xf]
      %v1488 = vld [vmem:[%s1306 + $0x1c] sm:$0xf]
      %v1489 = vld [vmem:[%s1306 + $0x20] sm:$0xf]
      %v1490 = vld [vmem:[%s1306 + $0x24] sm:$0xf]
      %s1491 = scalar_lea.vmem %s2, 40
      %v1492 = vld [vmem:[%s1491] sm:$0xf]
      %v1493 = vld [vmem:[%s1491 + $0x4] sm:$0x3]
      %v1502 = vunpack.c.l.b16 %v1483
      %v1503 = vunpack.c.l.b16 %v1484
      %v1504 = vunpack.c.l.b16 %v1485
      %v1505 = vunpack.c.l.b16 %v1486
      %v1506 = vunpack.c.l.b16 %v1487
      %v1507 = vunpack.c.l.b16 %v1488
      %v1508 = vunpack.c.l.b16 %v1489
      %v1509 = vunpack.c.l.b16 %v1490
      %v1510 = vpack.c.b16 %v1503, %v1502
      %v1511 = vpack.c.b16 %v1505, %v1504
      %v1512 = vpack.c.b16 %v1507, %v1506
      %v1513 = vpack.c.b16 %v1509, %v1508
      %v1516 = vunpack.c.l.b16 %v1492
      %v1517 = vunpack.c.l.b16 %v1493
      %v1518 = vpack.c.b16 %v1517, %v1516
      %v1520 = vsel %vm1117, %v1510, 0
      %v1523 = vsel %vm1117, %v1511, 0
      %v1526 = vsel %vm1117, %v1512, 0
      %v1529 = vsel %vm1117, %v1513, 0
      %v1532 = vsel %vm1130, %v1518, 0
      %1534 = vmatpush.bf16.msra.mxu0 0
      %1535 = vmatpush.bf16.msra.mxu0 0
      %1536 = vmatpush.bf16.msra.mxu0 0
      %1537 = vmatpush.bf16.msra.mxu0 0
      %1538 = vmatpush.bf16.msra.mxu0 0
      %1539 = vmatpush.bf16.msra.mxu0 0
      %1540 = vmatpush.bf16.msra.mxu0 0
      %1541 = vmatpush.bf16.msra.mxu0 %v1532
      %1542 = vmatmul.bf16.gmra.mxu0 %v1520
      %v1543 = vpop.f32.mrf.mxu0
      %v1544 = vadd.f32 0.0, %v1543
      %v1545 = vpop.f32.mrf.mxu0
      %v1546 = vadd.f32 0.0, %v1545
      %1547 = vmatmul.bf16.gmra.mxu0 %v1523
      %v1548 = vpop.f32.mrf.mxu0
      %v1549 = vadd.f32 0.0, %v1548
      %v1550 = vpop.f32.mrf.mxu0
      %v1551 = vadd.f32 0.0, %v1550
      %1552 = vmatmul.bf16.gmra.mxu0 %v1526
      %v1553 = vpop.f32.mrf.mxu0
      %v1554 = vadd.f32 0.0, %v1553
      %v1555 = vpop.f32.mrf.mxu0
      %v1556 = vadd.f32 0.0, %v1555
      %1557 = vmatmul.bf16.gmra.mxu0 %v1529
      %v1558 = vpop.f32.mrf.mxu0
      %v1559 = vadd.f32 0.0, %v1558
      %v1560 = vpop.f32.mrf.mxu0
      %v1561 = vadd.f32 0.0, %v1560
      %1562 = vdwg.mxu0
      %v1563 = vadd.f32 %v1475, %v1544
      %v1564 = vadd.f32 %v1476, %v1546
      %v1565 = vadd.f32 %v1477, %v1549
      %v1566 = vadd.f32 %v1478, %v1551
      %v1567 = vadd.f32 %v1479, %v1554
      %v1568 = vadd.f32 %v1480, %v1556
      %v1569 = vadd.f32 %v1481, %v1559
      %v1570 = vadd.f32 %v1482, %v1561
      %v1571 = vld [vmem:[%s278] sm:$0xf]
      %v1572 = vld [vmem:[%s278 + $0x4] sm:$0xf]
      %v1573 = vld [vmem:[%s278 + $0x8] sm:$0xf]
      %v1574 = vld [vmem:[%s278 + $0xc] sm:$0xf]
      %v1575 = vld [vmem:[%s278 + $0x10] sm:$0xf]
      %v1576 = vld [vmem:[%s278 + $0x14] sm:$0xf]
      %v1577 = vld [vmem:[%s278 + $0x18] sm:$0xf]
      %v1578 = vld [vmem:[%s278 + $0x1c] sm:$0xf]
      %s1579 = scalar_lea.vmem %s2, 48
      %v1580 = vld [vmem:[%s1579] sm:$0xf]
      %v1581 = vld [vmem:[%s1579 + $0x4] sm:$0x3]
      %v1590 = vunpack.c.l.b16 %v1571
      %v1591 = vunpack.c.l.b16 %v1572
      %v1592 = vunpack.c.l.b16 %v1573
      %v1593 = vunpack.c.l.b16 %v1574
      %v1594 = vunpack.c.l.b16 %v1575
      %v1595 = vunpack.c.l.b16 %v1576
      %v1596 = vunpack.c.l.b16 %v1577
      %v1597 = vunpack.c.l.b16 %v1578
      %v1598 = vpack.c.b16 %v1591, %v1590
      %v1599 = vpack.c.b16 %v1593, %v1592
      %v1600 = vpack.c.b16 %v1595, %v1594
      %v1601 = vpack.c.b16 %v1597, %v1596
      %v1604 = vunpack.c.l.b16 %v1580
      %v1605 = vunpack.c.l.b16 %v1581
      %v1606 = vpack.c.b16 %v1605, %v1604
      %v1608 = vsel %vm1117, %v1598, 0
      %v1611 = vsel %vm1117, %v1599, 0
      %v1614 = vsel %vm1117, %v1600, 0
      %v1617 = vsel %vm1117, %v1601, 0
      %v1620 = vsel %vm1130, %v1606, 0
      %1622 = vmatpush.bf16.msra.mxu0 0
      %1623 = vmatpush.bf16.msra.mxu0 0
      %1624 = vmatpush.bf16.msra.mxu0 0
      %1625 = vmatpush.bf16.msra.mxu0 0
      %1626 = vmatpush.bf16.msra.mxu0 0
      %1627 = vmatpush.bf16.msra.mxu0 0
      %1628 = vmatpush.bf16.msra.mxu0 0
      %1629 = vmatpush.bf16.msra.mxu0 %v1620
      %1630 = vmatmul.bf16.gmra.mxu0 %v1608
      %v1631 = vpop.f32.mrf.mxu0
      %v1632 = vadd.f32 0.0, %v1631
      %v1633 = vpop.f32.mrf.mxu0
      %v1634 = vadd.f32 0.0, %v1633
      %1635 = vmatmul.bf16.gmra.mxu0 %v1611
      %v1636 = vpop.f32.mrf.mxu0
      %v1637 = vadd.f32 0.0, %v1636
      %v1638 = vpop.f32.mrf.mxu0
      %v1639 = vadd.f32 0.0, %v1638
      %1640 = vmatmul.bf16.gmra.mxu0 %v1614
      %v1641 = vpop.f32.mrf.mxu0
      %v1642 = vadd.f32 0.0, %v1641
      %v1643 = vpop.f32.mrf.mxu0
      %v1644 = vadd.f32 0.0, %v1643
      %1645 = vmatmul.bf16.gmra.mxu0 %v1617
      %v1646 = vpop.f32.mrf.mxu0
      %v1647 = vadd.f32 0.0, %v1646
      %v1648 = vpop.f32.mrf.mxu0
      %v1649 = vadd.f32 0.0, %v1648
      %1650 = vdwg.mxu0
      %v1651 = vadd.f32 %v1563, %v1632
      %v1652 = vadd.f32 %v1564, %v1634
      %v1653 = vadd.f32 %v1565, %v1637
      %v1654 = vadd.f32 %v1566, %v1639
      %v1655 = vadd.f32 %v1567, %v1642
      %v1656 = vadd.f32 %v1568, %v1644
      %v1657 = vadd.f32 %v1569, %v1647
      %v1658 = vadd.f32 %v1570, %v1649
      %v1659 = vld [vmem:[%s278 + $0x4] sm:$0xf]
      %v1660 = vld [vmem:[%s278 + $0x8] sm:$0xf]
      %v1661 = vld [vmem:[%s278 + $0xc] sm:$0xf]
      %v1662 = vld [vmem:[%s278 + $0x10] sm:$0xf]
      %v1663 = vld [vmem:[%s278 + $0x14] sm:$0xf]
      %v1664 = vld [vmem:[%s278 + $0x18] sm:$0xf]
      %v1665 = vld [vmem:[%s278 + $0x1c] sm:$0xf]
      %v1666 = vld [vmem:[%s278 + $0x20] sm:$0xf]
      %s1667 = scalar_lea.vmem %s2, 56
      %v1668 = vld [vmem:[%s1667] sm:$0xf]
      %v1669 = vld [vmem:[%s1667 + $0x4] sm:$0x3]
      %v1678 = vunpack.c.l.b16 %v1659
      %v1679 = vunpack.c.l.b16 %v1660
      %v1680 = vunpack.c.l.b16 %v1661
      %v1681 = vunpack.c.l.b16 %v1662
      %v1682 = vunpack.c.l.b16 %v1663
      %v1683 = vunpack.c.l.b16 %v1664
      %v1684 = vunpack.c.l.b16 %v1665
      %v1685 = vunpack.c.l.b16 %v1666
      %v1686 = vpack.c.b16 %v1679, %v1678
      %v1687 = vpack.c.b16 %v1681, %v1680
      %v1688 = vpack.c.b16 %v1683, %v1682
      %v1689 = vpack.c.b16 %v1685, %v1684
      %v1692 = vunpack.c.l.b16 %v1668
      %v1693 = vunpack.c.l.b16 %v1669
      %v1694 = vpack.c.b16 %v1693, %v1692
      %v1696 = vsel %vm1117, %v1686, 0
      %v1699 = vsel %vm1117, %v1687, 0
      %v1702 = vsel %vm1117, %v1688, 0
      %v1705 = vsel %vm1117, %v1689, 0
      %v1708 = vsel %vm1130, %v1694, 0
      %1710 = vmatpush.bf16.msra.mxu0 0
      %1711 = vmatpush.bf16.msra.mxu0 0
      %1712 = vmatpush.bf16.msra.mxu0 0
      %1713 = vmatpush.bf16.msra.mxu0 0
      %1714 = vmatpush.bf16.msra.mxu0 0
      %1715 = vmatpush.bf16.msra.mxu0 0
      %1716 = vmatpush.bf16.msra.mxu0 0
      %1717 = vmatpush.bf16.msra.mxu0 %v1708
      %1718 = vmatmul.bf16.gmra.mxu0 %v1696
      %v1719 = vpop.f32.mrf.mxu0
      %v1720 = vadd.f32 0.0, %v1719
      %v1721 = vpop.f32.mrf.mxu0
      %v1722 = vadd.f32 0.0, %v1721
      %1723 = vmatmul.bf16.gmra.mxu0 %v1699
      %v1724 = vpop.f32.mrf.mxu0
      %v1725 = vadd.f32 0.0, %v1724
      %v1726 = vpop.f32.mrf.mxu0
      %v1727 = vadd.f32 0.0, %v1726
      %1728 = vmatmul.bf16.gmra.mxu0 %v1702
      %v1729 = vpop.f32.mrf.mxu0
      %v1730 = vadd.f32 0.0, %v1729
      %v1731 = vpop.f32.mrf.mxu0
      %v1732 = vadd.f32 0.0, %v1731
      %1733 = vmatmul.bf16.gmra.mxu0 %v1705
      %v1734 = vpop.f32.mrf.mxu0
      %v1735 = vadd.f32 0.0, %v1734
      %v1736 = vpop.f32.mrf.mxu0
      %v1737 = vadd.f32 0.0, %v1736
      %1738 = vdwg.mxu0
      %v1739 = vadd.f32 %v1651, %v1720
      %v1740 = vadd.f32 %v1652, %v1722
      %v1741 = vadd.f32 %v1653, %v1725
      %v1742 = vadd.f32 %v1654, %v1727
      %v1743 = vadd.f32 %v1655, %v1730
      %v1744 = vadd.f32 %v1656, %v1732
      %v1745 = vadd.f32 %v1657, %v1735
      %v1746 = vadd.f32 %v1658, %v1737
      %v1747 = vld [vmem:[%s278 + $0x8] sm:$0xf]
      %v1748 = vld [vmem:[%s278 + $0xc] sm:$0xf]
      %v1749 = vld [vmem:[%s278 + $0x10] sm:$0xf]
      %v1750 = vld [vmem:[%s278 + $0x14] sm:$0xf]
      %v1751 = vld [vmem:[%s278 + $0x18] sm:$0xf]
      %v1752 = vld [vmem:[%s278 + $0x1c] sm:$0xf]
      %v1753 = vld [vmem:[%s278 + $0x20] sm:$0xf]
      %v1754 = vld [vmem:[%s278 + $0x24] sm:$0xf]
      %s1755 = scalar_lea.vmem %s2, 64
      %v1756 = vld [vmem:[%s1755] sm:$0xf]
      %v1757 = vld [vmem:[%s1755 + $0x4] sm:$0x3]
      %v1766 = vunpack.c.l.b16 %v1747
      %v1767 = vunpack.c.l.b16 %v1748
      %v1768 = vunpack.c.l.b16 %v1749
      %v1769 = vunpack.c.l.b16 %v1750
      %v1770 = vunpack.c.l.b16 %v1751
      %v1771 = vunpack.c.l.b16 %v1752
      %v1772 = vunpack.c.l.b16 %v1753
      %v1773 = vunpack.c.l.b16 %v1754
      %v1774 = vpack.c.b16 %v1767, %v1766
      %v1775 = vpack.c.b16 %v1769, %v1768
      %v1776 = vpack.c.b16 %v1771, %v1770
      %v1777 = vpack.c.b16 %v1773, %v1772
      %v1780 = vunpack.c.l.b16 %v1756
      %v1781 = vunpack.c.l.b16 %v1757
      %v1782 = vpack.c.b16 %v1781, %v1780
      %v1784 = vsel %vm1117, %v1774, 0
      %v1787 = vsel %vm1117, %v1775, 0
      %v1790 = vsel %vm1117, %v1776, 0
      %v1793 = vsel %vm1117, %v1777, 0
      %v1796 = vsel %vm1130, %v1782, 0
      %1798 = vmatpush.bf16.msra.mxu0 0
      %1799 = vmatpush.bf16.msra.mxu0 0
      %1800 = vmatpush.bf16.msra.mxu0 0
      %1801 = vmatpush.bf16.msra.mxu0 0
      %1802 = vmatpush.bf16.msra.mxu0 0
      %1803 = vmatpush.bf16.msra.mxu0 0
      %1804 = vmatpush.bf16.msra.mxu0 0
      %1805 = vmatpush.bf16.msra.mxu0 %v1796
      %1806 = vmatmul.bf16.gmra.mxu0 %v1784
      %v1807 = vpop.f32.mrf.mxu0
      %v1808 = vadd.f32 0.0, %v1807
      %v1809 = vpop.f32.mrf.mxu0
      %v1810 = vadd.f32 0.0, %v1809
      %1811 = vmatmul.bf16.gmra.mxu0 %v1787
      %v1812 = vpop.f32.mrf.mxu0
      %v1813 = vadd.f32 0.0, %v1812
      %v1814 = vpop.f32.mrf.mxu0
      %v1815 = vadd.f32 0.0, %v1814
      %1816 = vmatmul.bf16.gmra.mxu0 %v1790
      %v1817 = vpop.f32.mrf.mxu0
      %v1818 = vadd.f32 0.0, %v1817
      %v1819 = vpop.f32.mrf.mxu0
      %v1820 = vadd.f32 0.0, %v1819
      %1821 = vmatmul.bf16.gmra.mxu0 %v1793
      %v1822 = vpop.f32.mrf.mxu0
      %v1823 = vadd.f32 0.0, %v1822
      %v1824 = vpop.f32.mrf.mxu0
      %v1825 = vadd.f32 0.0, %v1824
      %1826 = vdwg.mxu0
      %v1827 = vadd.f32 %v1739, %v1808
      %v1828 = vadd.f32 %v1740, %v1810
      %v1829 = vadd.f32 %v1741, %v1813
      %v1830 = vadd.f32 %v1742, %v1815
      %v1831 = vadd.f32 %v1743, %v1818
      %v1832 = vadd.f32 %v1744, %v1820
      %v1833 = vadd.f32 %v1745, %v1823
      %v1834 = vadd.f32 %v1746, %v1825
      %s1835 = scalar_lea.vmem %s291, 384
      %1836 = vst [vmem:[%s1835] sm:$0xff] %v1827
      %1837 = vst [vmem:[%s1835 + $0x8] sm:$0xff] %v1828
      %1838 = vst [vmem:[%s1835 + $0x10] sm:$0xff] %v1829
      %1839 = vst [vmem:[%s1835 + $0x18] sm:$0xff] %v1830
      %1840 = vst [vmem:[%s1835 + $0x20] sm:$0xff] %v1831
      %1841 = vst [vmem:[%s1835 + $0x28] sm:$0xff] %v1832
      %1842 = vst [vmem:[%s1835 + $0x30] sm:$0xff] %v1833
      %1843 = vst [vmem:[%s1835 + $0x38] sm:$0xff] %v1834
      %v1844 = vld [vmem:[%s1306] sm:$0xf]
      %v1845 = vld [vmem:[%s1306 + $0x4] sm:$0xf]
      %v1846 = vld [vmem:[%s1306 + $0x8] sm:$0xf]
      %v1847 = vld [vmem:[%s1306 + $0xc] sm:$0xf]
      %v1848 = vld [vmem:[%s1306 + $0x10] sm:$0xf]
      %v1849 = vld [vmem:[%s1306 + $0x14] sm:$0xf]
      %v1850 = vld [vmem:[%s1306 + $0x18] sm:$0xf]
      %v1851 = vld [vmem:[%s1306 + $0x1c] sm:$0xf]
      %v1852 = vld [vmem:[%s2] sm:$0xf]
      %v1853 = vld [vmem:[%s2 + $0x4] sm:$0x3]
      %v1854 = vld [vmem:[%s1306 + $0x20] sm:$0xf]
      %v1855 = vld [vmem:[%s1089] sm:$0xf]
      %v1856 = vld [vmem:[%s1089 + $0x4] sm:$0x3]
      %v1865 = vunpack.c.l.b16 %v1845
      %v1866 = vunpack.c.l.b16 %v1846
      %v1867 = vunpack.c.l.b16 %v1847
      %v1868 = vunpack.c.l.b16 %v1848
      %v1869 = vunpack.c.l.b16 %v1849
      %v1870 = vunpack.c.l.b16 %v1850
      %v1871 = vunpack.c.l.b16 %v1851
      %v1872 = vunpack.c.l.b16 %v1854
      %v1873 = vpack.c.b16 %v1866, %v1865
      %v1874 = vpack.c.b16 %v1868, %v1867
      %v1875 = vpack.c.b16 %v1870, %v1869
      %v1876 = vpack.c.b16 %v1872, %v1871
      %v1879 = vunpack.c.l.b16 %v1855
      %v1880 = vunpack.c.l.b16 %v1856
      %v1881 = vpack.c.b16 %v1880, %v1879
      %v1883 = vsel %vm1117, %v1873, 0
      %v1886 = vsel %vm1117, %v1874, 0
      %v1889 = vsel %vm1117, %v1875, 0
      %v1892 = vsel %vm1117, %v1876, 0
      %v1895 = vsel %vm1130, %v1881, 0
      %1897 = vmatpush.bf16.msra.mxu0 0
      %1898 = vmatpush.bf16.msra.mxu0 0
      %1899 = vmatpush.bf16.msra.mxu0 0
      %1900 = vmatpush.bf16.msra.mxu0 0
      %1901 = vmatpush.bf16.msra.mxu0 0
      %1902 = vmatpush.bf16.msra.mxu0 0
      %1903 = vmatpush.bf16.msra.mxu0 0
      %1904 = vmatpush.bf16.msra.mxu0 %v1895
      %1905 = vmatmul.bf16.gmra.mxu0 %v1883
      %v1906 = vpop.f32.mrf.mxu0
      %v1907 = vadd.f32 0.0, %v1906
      %v1908 = vpop.f32.mrf.mxu0
      %v1909 = vadd.f32 0.0, %v1908
      %1910 = vmatmul.bf16.gmra.mxu0 %v1886
      %v1911 = vpop.f32.mrf.mxu0
      %v1912 = vadd.f32 0.0, %v1911
      %v1913 = vpop.f32.mrf.mxu0
      %v1914 = vadd.f32 0.0, %v1913
      %1915 = vmatmul.bf16.gmra.mxu0 %v1889
      %v1916 = vpop.f32.mrf.mxu0
      %v1917 = vadd.f32 0.0, %v1916
      %v1918 = vpop.f32.mrf.mxu0
      %v1919 = vadd.f32 0.0, %v1918
      %1920 = vmatmul.bf16.gmra.mxu0 %v1892
      %v1921 = vpop.f32.mrf.mxu0
      %v1922 = vadd.f32 0.0, %v1921
      %v1923 = vpop.f32.mrf.mxu0
      %v1924 = vadd.f32 0.0, %v1923
      %1925 = vdwg.mxu0
      %v1927 = vunpack.c.l.b16 %v1844
      %v1928 = vpack.c.b16 %v1865, %v1927
      %v1929 = vpack.c.b16 %v1867, %v1866
      %v1930 = vpack.c.b16 %v1869, %v1868
      %v1931 = vpack.c.b16 %v1871, %v1870
      %v1934 = vunpack.c.l.b16 %v1852
      %v1935 = vunpack.c.l.b16 %v1853
      %v1936 = vpack.c.b16 %v1935, %v1934
      %v1938 = vsel %vm1117, %v1928, 0
      %v1941 = vsel %vm1117, %v1929, 0
      %v1944 = vsel %vm1117, %v1930, 0
      %v1947 = vsel %vm1117, %v1931, 0
      %v1950 = vsel %vm1130, %v1936, 0
      %1952 = vmatpush.bf16.msra.mxu0 0
      %1953 = vmatpush.bf16.msra.mxu0 0
      %1954 = vmatpush.bf16.msra.mxu0 0
      %1955 = vmatpush.bf16.msra.mxu0 0
      %1956 = vmatpush.bf16.msra.mxu0 0
      %1957 = vmatpush.bf16.msra.mxu0 0
      %1958 = vmatpush.bf16.msra.mxu0 0
      %1959 = vmatpush.bf16.msra.mxu0 %v1950
      %1960 = vmatmul.bf16.gmra.mxu0 %v1938
      %v1961 = vpop.f32.mrf.mxu0
      %v1962 = vadd.f32 %v1907, %v1961
      %v1963 = vpop.f32.mrf.mxu0
      %v1964 = vadd.f32 %v1909, %v1963
      %1965 = vmatmul.bf16.gmra.mxu0 %v1941
      %v1966 = vpop.f32.mrf.mxu0
      %v1967 = vadd.f32 %v1912, %v1966
      %v1968 = vpop.f32.mrf.mxu0
      %v1969 = vadd.f32 %v1914, %v1968
      %1970 = vmatmul.bf16.gmra.mxu0 %v1944
      %v1971 = vpop.f32.mrf.mxu0
      %v1972 = vadd.f32 %v1917, %v1971
      %v1973 = vpop.f32.mrf.mxu0
      %v1974 = vadd.f32 %v1919, %v1973
      %1975 = vmatmul.bf16.gmra.mxu0 %v1947
      %v1976 = vpop.f32.mrf.mxu0
      %v1977 = vadd.f32 %v1922, %v1976
      %v1978 = vpop.f32.mrf.mxu0
      %v1979 = vadd.f32 %v1924, %v1978
      %1980 = vdwg.mxu0
      %v1981 = vld [vmem:[%s1306 + $0x8] sm:$0xf]
      %v1982 = vld [vmem:[%s1306 + $0xc] sm:$0xf]
      %v1983 = vld [vmem:[%s1306 + $0x10] sm:$0xf]
      %v1984 = vld [vmem:[%s1306 + $0x14] sm:$0xf]
      %v1985 = vld [vmem:[%s1306 + $0x18] sm:$0xf]
      %v1986 = vld [vmem:[%s1306 + $0x1c] sm:$0xf]
      %v1987 = vld [vmem:[%s1306 + $0x20] sm:$0xf]
      %v1988 = vld [vmem:[%s1306 + $0x24] sm:$0xf]
      %v1989 = vld [vmem:[%s1226] sm:$0xf]
      %v1990 = vld [vmem:[%s1226 + $0x4] sm:$0x3]
      %v1999 = vunpack.c.l.b16 %v1981
      %v2000 = vunpack.c.l.b16 %v1982
      %v2001 = vunpack.c.l.b16 %v1983
      %v2002 = vunpack.c.l.b16 %v1984
      %v2003 = vunpack.c.l.b16 %v1985
      %v2004 = vunpack.c.l.b16 %v1986
      %v2005 = vunpack.c.l.b16 %v1987
      %v2006 = vunpack.c.l.b16 %v1988
      %v2007 = vpack.c.b16 %v2000, %v1999
      %v2008 = vpack.c.b16 %v2002, %v2001
      %v2009 = vpack.c.b16 %v2004, %v2003
      %v2010 = vpack.c.b16 %v2006, %v2005
      %v2013 = vunpack.c.l.b16 %v1989
      %v2014 = vunpack.c.l.b16 %v1990
      %v2015 = vpack.c.b16 %v2014, %v2013
      %v2017 = vsel %vm1117, %v2007, 0
      %v2020 = vsel %vm1117, %v2008, 0
      %v2023 = vsel %vm1117, %v2009, 0
      %v2026 = vsel %vm1117, %v2010, 0
      %v2029 = vsel %vm1130, %v2015, 0
      %2031 = vmatpush.bf16.msra.mxu0 0
      %2032 = vmatpush.bf16.msra.mxu0 0
      %2033 = vmatpush.bf16.msra.mxu0 0
      %2034 = vmatpush.bf16.msra.mxu0 0
      %2035 = vmatpush.bf16.msra.mxu0 0
      %2036 = vmatpush.bf16.msra.mxu0 0
      %2037 = vmatpush.bf16.msra.mxu0 0
      %2038 = vmatpush.bf16.msra.mxu0 %v2029
      %2039 = vmatmul.bf16.gmra.mxu0 %v2017
      %v2040 = vpop.f32.mrf.mxu0
      %v2041 = vadd.f32 0.0, %v2040
      %v2042 = vpop.f32.mrf.mxu0
      %v2043 = vadd.f32 0.0, %v2042
      %2044 = vmatmul.bf16.gmra.mxu0 %v2020
      %v2045 = vpop.f32.mrf.mxu0
      %v2046 = vadd.f32 0.0, %v2045
      %v2047 = vpop.f32.mrf.mxu0
      %v2048 = vadd.f32 0.0, %v2047
      %2049 = vmatmul.bf16.gmra.mxu0 %v2023
      %v2050 = vpop.f32.mrf.mxu0
      %v2051 = vadd.f32 0.0, %v2050
      %v2052 = vpop.f32.mrf.mxu0
      %v2053 = vadd.f32 0.0, %v2052
      %2054 = vmatmul.bf16.gmra.mxu0 %v2026
      %v2055 = vpop.f32.mrf.mxu0
      %v2056 = vadd.f32 0.0, %v2055
      %v2057 = vpop.f32.mrf.mxu0
      %v2058 = vadd.f32 0.0, %v2057
      %2059 = vdwg.mxu0
      %v2060 = vadd.f32 %v1962, %v2041
      %v2061 = vadd.f32 %v1964, %v2043
      %v2062 = vadd.f32 %v1967, %v2046
      %v2063 = vadd.f32 %v1969, %v2048
      %v2064 = vadd.f32 %v1972, %v2051
      %v2065 = vadd.f32 %v1974, %v2053
      %v2066 = vadd.f32 %v1977, %v2056
      %v2067 = vadd.f32 %v1979, %v2058
      %v2068 = vld [vmem:[%s278] sm:$0xf]
      %v2069 = vld [vmem:[%s278 + $0x4] sm:$0xf]
      %v2070 = vld [vmem:[%s278 + $0x8] sm:$0xf]
      %v2071 = vld [vmem:[%s278 + $0xc] sm:$0xf]
      %v2072 = vld [vmem:[%s278 + $0x10] sm:$0xf]
      %v2073 = vld [vmem:[%s278 + $0x14] sm:$0xf]
      %v2074 = vld [vmem:[%s278 + $0x18] sm:$0xf]
      %v2075 = vld [vmem:[%s278 + $0x1c] sm:$0xf]
      %v2076 = vld [vmem:[%s1315] sm:$0xf]
      %v2077 = vld [vmem:[%s1315 + $0x4] sm:$0x3]
      %v2086 = vunpack.c.l.b16 %v2068
      %v2087 = vunpack.c.l.b16 %v2069
      %v2088 = vunpack.c.l.b16 %v2070
      %v2089 = vunpack.c.l.b16 %v2071
      %v2090 = vunpack.c.l.b16 %v2072
      %v2091 = vunpack.c.l.b16 %v2073
      %v2092 = vunpack.c.l.b16 %v2074
      %v2093 = vunpack.c.l.b16 %v2075
      %v2094 = vpack.c.b16 %v2087, %v2086
      %v2095 = vpack.c.b16 %v2089, %v2088
      %v2096 = vpack.c.b16 %v2091, %v2090
      %v2097 = vpack.c.b16 %v2093, %v2092
      %v2100 = vunpack.c.l.b16 %v2076
      %v2101 = vunpack.c.l.b16 %v2077
      %v2102 = vpack.c.b16 %v2101, %v2100
      %v2104 = vsel %vm1117, %v2094, 0
      %v2107 = vsel %vm1117, %v2095, 0
      %v2110 = vsel %vm1117, %v2096, 0
      %v2113 = vsel %vm1117, %v2097, 0
      %v2116 = vsel %vm1130, %v2102, 0
      %2118 = vmatpush.bf16.msra.mxu0 0
      %2119 = vmatpush.bf16.msra.mxu0 0
      %2120 = vmatpush.bf16.msra.mxu0 0
      %2121 = vmatpush.bf16.msra.mxu0 0
      %2122 = vmatpush.bf16.msra.mxu0 0
      %2123 = vmatpush.bf16.msra.mxu0 0
      %2124 = vmatpush.bf16.msra.mxu0 0
      %2125 = vmatpush.bf16.msra.mxu0 %v2116
      %2126 = vmatmul.bf16.gmra.mxu0 %v2104
      %v2127 = vpop.f32.mrf.mxu0
      %v2128 = vadd.f32 0.0, %v2127
      %v2129 = vpop.f32.mrf.mxu0
      %v2130 = vadd.f32 0.0, %v2129
      %2131 = vmatmul.bf16.gmra.mxu0 %v2107
      %v2132 = vpop.f32.mrf.mxu0
      %v2133 = vadd.f32 0.0, %v2132
      %v2134 = vpop.f32.mrf.mxu0
      %v2135 = vadd.f32 0.0, %v2134
      %2136 = vmatmul.bf16.gmra.mxu0 %v2110
      %v2137 = vpop.f32.mrf.mxu0
      %v2138 = vadd.f32 0.0, %v2137
      %v2139 = vpop.f32.mrf.mxu0
      %v2140 = vadd.f32 0.0, %v2139
      %2141 = vmatmul.bf16.gmra.mxu0 %v2113
      %v2142 = vpop.f32.mrf.mxu0
      %v2143 = vadd.f32 0.0, %v2142
      %v2144 = vpop.f32.mrf.mxu0
      %v2145 = vadd.f32 0.0, %v2144
      %2146 = vdwg.mxu0
      %v2147 = vadd.f32 %v2060, %v2128
      %v2148 = vadd.f32 %v2061, %v2130
      %v2149 = vadd.f32 %v2062, %v2133
      %v2150 = vadd.f32 %v2063, %v2135
      %v2151 = vadd.f32 %v2064, %v2138
      %v2152 = vadd.f32 %v2065, %v2140
      %v2153 = vadd.f32 %v2066, %v2143
      %v2154 = vadd.f32 %v2067, %v2145
      %v2155 = vld [vmem:[%s278 + $0x4] sm:$0xf]
      %v2156 = vld [vmem:[%s278 + $0x8] sm:$0xf]
      %v2157 = vld [vmem:[%s278 + $0xc] sm:$0xf]
      %v2158 = vld [vmem:[%s278 + $0x10] sm:$0xf]
      %v2159 = vld [vmem:[%s278 + $0x14] sm:$0xf]
      %v2160 = vld [vmem:[%s278 + $0x18] sm:$0xf]
      %v2161 = vld [vmem:[%s278 + $0x1c] sm:$0xf]
      %v2162 = vld [vmem:[%s278 + $0x20] sm:$0xf]
      %v2163 = vld [vmem:[%s1403] sm:$0xf]
      %v2164 = vld [vmem:[%s1403 + $0x4] sm:$0x3]
      %v2173 = vunpack.c.l.b16 %v2155
      %v2174 = vunpack.c.l.b16 %v2156
      %v2175 = vunpack.c.l.b16 %v2157
      %v2176 = vunpack.c.l.b16 %v2158
      %v2177 = vunpack.c.l.b16 %v2159
      %v2178 = vunpack.c.l.b16 %v2160
      %v2179 = vunpack.c.l.b16 %v2161
      %v2180 = vunpack.c.l.b16 %v2162
      %v2181 = vpack.c.b16 %v2174, %v2173
      %v2182 = vpack.c.b16 %v2176, %v2175
      %v2183 = vpack.c.b16 %v2178, %v2177
      %v2184 = vpack.c.b16 %v2180, %v2179
      %v2187 = vunpack.c.l.b16 %v2163
      %v2188 = vunpack.c.l.b16 %v2164
      %v2189 = vpack.c.b16 %v2188, %v2187
      %v2191 = vsel %vm1117, %v2181, 0
      %v2194 = vsel %vm1117, %v2182, 0
      %v2197 = vsel %vm1117, %v2183, 0
      %v2200 = vsel %vm1117, %v2184, 0
      %v2203 = vsel %vm1130, %v2189, 0
      %2205 = vmatpush.bf16.msra.mxu0 0
      %2206 = vmatpush.bf16.msra.mxu0 0
      %2207 = vmatpush.bf16.msra.mxu0 0
      %2208 = vmatpush.bf16.msra.mxu0 0
      %2209 = vmatpush.bf16.msra.mxu0 0
      %2210 = vmatpush.bf16.msra.mxu0 0
      %2211 = vmatpush.bf16.msra.mxu0 0
      %2212 = vmatpush.bf16.msra.mxu0 %v2203
      %2213 = vmatmul.bf16.gmra.mxu0 %v2191
      %v2214 = vpop.f32.mrf.mxu0
      %v2215 = vadd.f32 0.0, %v2214
      %v2216 = vpop.f32.mrf.mxu0
      %v2217 = vadd.f32 0.0, %v2216
      %2218 = vmatmul.bf16.gmra.mxu0 %v2194
      %v2219 = vpop.f32.mrf.mxu0
      %v2220 = vadd.f32 0.0, %v2219
      %v2221 = vpop.f32.mrf.mxu0
      %v2222 = vadd.f32 0.0, %v2221
      %2223 = vmatmul.bf16.gmra.mxu0 %v2197
      %v2224 = vpop.f32.mrf.mxu0
      %v2225 = vadd.f32 0.0, %v2224
      %v2226 = vpop.f32.mrf.mxu0
      %v2227 = vadd.f32 0.0, %v2226
      %2228 = vmatmul.bf16.gmra.mxu0 %v2200
      %v2229 = vpop.f32.mrf.mxu0
      %v2230 = vadd.f32 0.0, %v2229
      %v2231 = vpop.f32.mrf.mxu0
      %v2232 = vadd.f32 0.0, %v2231
      %2233 = vdwg.mxu0
      %v2234 = vadd.f32 %v2147, %v2215
      %v2235 = vadd.f32 %v2148, %v2217
      %v2236 = vadd.f32 %v2149, %v2220
      %v2237 = vadd.f32 %v2150, %v2222
      %v2238 = vadd.f32 %v2151, %v2225
      %v2239 = vadd.f32 %v2152, %v2227
      %v2240 = vadd.f32 %v2153, %v2230
      %v2241 = vadd.f32 %v2154, %v2232
      %v2242 = vld [vmem:[%s278 + $0x8] sm:$0xf]
      %v2243 = vld [vmem:[%s278 + $0xc] sm:$0xf]
      %v2244 = vld [vmem:[%s278 + $0x10] sm:$0xf]
      %v2245 = vld [vmem:[%s278 + $0x14] sm:$0xf]
      %v2246 = vld [vmem:[%s278 + $0x18] sm:$0xf]
      %v2247 = vld [vmem:[%s278 + $0x1c] sm:$0xf]
      %v2248 = vld [vmem:[%s278 + $0x20] sm:$0xf]
      %v2249 = vld [vmem:[%s278 + $0x24] sm:$0xf]
      %v2250 = vld [vmem:[%s1491] sm:$0xf]
      %v2251 = vld [vmem:[%s1491 + $0x4] sm:$0x3]
      %v2260 = vunpack.c.l.b16 %v2242
      %v2261 = vunpack.c.l.b16 %v2243
      %v2262 = vunpack.c.l.b16 %v2244
      %v2263 = vunpack.c.l.b16 %v2245
      %v2264 = vunpack.c.l.b16 %v2246
      %v2265 = vunpack.c.l.b16 %v2247
      %v2266 = vunpack.c.l.b16 %v2248
      %v2267 = vunpack.c.l.b16 %v2249
      %v2268 = vpack.c.b16 %v2261, %v2260
      %v2269 = vpack.c.b16 %v2263, %v2262
      %v2270 = vpack.c.b16 %v2265, %v2264
      %v2271 = vpack.c.b16 %v2267, %v2266
      %v2274 = vunpack.c.l.b16 %v2250
      %v2275 = vunpack.c.l.b16 %v2251
      %v2276 = vpack.c.b16 %v2275, %v2274
      %v2278 = vsel %vm1117, %v2268, 0
      %v2281 = vsel %vm1117, %v2269, 0
      %v2284 = vsel %vm1117, %v2270, 0
      %v2287 = vsel %vm1117, %v2271, 0
      %v2290 = vsel %vm1130, %v2276, 0
      %2292 = vmatpush.bf16.msra.mxu0 0
      %2293 = vmatpush.bf16.msra.mxu0 0
      %2294 = vmatpush.bf16.msra.mxu0 0
      %2295 = vmatpush.bf16.msra.mxu0 0
      %2296 = vmatpush.bf16.msra.mxu0 0
      %2297 = vmatpush.bf16.msra.mxu0 0
      %2298 = vmatpush.bf16.msra.mxu0 0
      %2299 = vmatpush.bf16.msra.mxu0 %v2290
      %2300 = vmatmul.bf16.gmra.mxu0 %v2278
      %v2301 = vpop.f32.mrf.mxu0
      %v2302 = vadd.f32 0.0, %v2301
      %v2303 = vpop.f32.mrf.mxu0
      %v2304 = vadd.f32 0.0, %v2303
      %2305 = vmatmul.bf16.gmra.mxu0 %v2281
      %v2306 = vpop.f32.mrf.mxu0
      %v2307 = vadd.f32 0.0, %v2306
      %v2308 = vpop.f32.mrf.mxu0
      %v2309 = vadd.f32 0.0, %v2308
      %2310 = vmatmul.bf16.gmra.mxu0 %v2284
      %v2311 = vpop.f32.mrf.mxu0
      %v2312 = vadd.f32 0.0, %v2311
      %v2313 = vpop.f32.mrf.mxu0
      %v2314 = vadd.f32 0.0, %v2313
      %2315 = vmatmul.bf16.gmra.mxu0 %v2287
      %v2316 = vpop.f32.mrf.mxu0
      %v2317 = vadd.f32 0.0, %v2316
      %v2318 = vpop.f32.mrf.mxu0
      %v2319 = vadd.f32 0.0, %v2318
      %2320 = vdwg.mxu0
      %v2321 = vadd.f32 %v2234, %v2302
      %v2322 = vadd.f32 %v2235, %v2304
      %v2323 = vadd.f32 %v2236, %v2307
      %v2324 = vadd.f32 %v2237, %v2309
      %v2325 = vadd.f32 %v2238, %v2312
      %v2326 = vadd.f32 %v2239, %v2314
      %v2327 = vadd.f32 %v2240, %v2317
      %v2328 = vadd.f32 %v2241, %v2319
      %s2329 = scalar_lea.vmem %s278, 40
      %v2330 = vld [vmem:[%s2329] sm:$0xf]
      %v2331 = vld [vmem:[%s2329 + $0x4] sm:$0xf]
      %v2332 = vld [vmem:[%s2329 + $0x8] sm:$0xf]
      %v2333 = vld [vmem:[%s2329 + $0xc] sm:$0xf]
      %v2334 = vld [vmem:[%s2329 + $0x10] sm:$0xf]
      %v2335 = vld [vmem:[%s2329 + $0x14] sm:$0xf]
      %v2336 = vld [vmem:[%s2329 + $0x18] sm:$0xf]
      %v2337 = vld [vmem:[%s2329 + $0x1c] sm:$0xf]
      %v2338 = vld [vmem:[%s1579] sm:$0xf]
      %v2339 = vld [vmem:[%s1579 + $0x4] sm:$0x3]
      %v2348 = vunpack.c.l.b16 %v2330
      %v2349 = vunpack.c.l.b16 %v2331
      %v2350 = vunpack.c.l.b16 %v2332
      %v2351 = vunpack.c.l.b16 %v2333
      %v2352 = vunpack.c.l.b16 %v2334
      %v2353 = vunpack.c.l.b16 %v2335
      %v2354 = vunpack.c.l.b16 %v2336
      %v2355 = vunpack.c.l.b16 %v2337
      %v2356 = vpack.c.b16 %v2349, %v2348
      %v2357 = vpack.c.b16 %v2351, %v2350
      %v2358 = vpack.c.b16 %v2353, %v2352
      %v2359 = vpack.c.b16 %v2355, %v2354
      %v2362 = vunpack.c.l.b16 %v2338
      %v2363 = vunpack.c.l.b16 %v2339
      %v2364 = vpack.c.b16 %v2363, %v2362
      %v2366 = vsel %vm1117, %v2356, 0
      %v2369 = vsel %vm1117, %v2357, 0
      %v2372 = vsel %vm1117, %v2358, 0
      %v2375 = vsel %vm1117, %v2359, 0
      %v2378 = vsel %vm1130, %v2364, 0
      %2380 = vmatpush.bf16.msra.mxu0 0
      %2381 = vmatpush.bf16.msra.mxu0 0
      %2382 = vmatpush.bf16.msra.mxu0 0
      %2383 = vmatpush.bf16.msra.mxu0 0
      %2384 = vmatpush.bf16.msra.mxu0 0
      %2385 = vmatpush.bf16.msra.mxu0 0
      %2386 = vmatpush.bf16.msra.mxu0 0
      %2387 = vmatpush.bf16.msra.mxu0 %v2378
      %2388 = vmatmul.bf16.gmra.mxu0 %v2366
      %v2389 = vpop.f32.mrf.mxu0
      %v2390 = vadd.f32 0.0, %v2389
      %v2391 = vpop.f32.mrf.mxu0
      %v2392 = vadd.f32 0.0, %v2391
      %2393 = vmatmul.bf16.gmra.mxu0 %v2369
      %v2394 = vpop.f32.mrf.mxu0
      %v2395 = vadd.f32 0.0, %v2394
      %v2396 = vpop.f32.mrf.mxu0
      %v2397 = vadd.f32 0.0, %v2396
      %2398 = vmatmul.bf16.gmra.mxu0 %v2372
      %v2399 = vpop.f32.mrf.mxu0
      %v2400 = vadd.f32 0.0, %v2399
      %v2401 = vpop.f32.mrf.mxu0
      %v2402 = vadd.f32 0.0, %v2401
      %2403 = vmatmul.bf16.gmra.mxu0 %v2375
      %v2404 = vpop.f32.mrf.mxu0
      %v2405 = vadd.f32 0.0, %v2404
      %v2406 = vpop.f32.mrf.mxu0
      %v2407 = vadd.f32 0.0, %v2406
      %2408 = vdwg.mxu0
      %v2409 = vadd.f32 %v2321, %v2390
      %v2410 = vadd.f32 %v2322, %v2392
      %v2411 = vadd.f32 %v2323, %v2395
      %v2412 = vadd.f32 %v2324, %v2397
      %v2413 = vadd.f32 %v2325, %v2400
      %v2414 = vadd.f32 %v2326, %v2402
      %v2415 = vadd.f32 %v2327, %v2405
      %v2416 = vadd.f32 %v2328, %v2407
      %v2417 = vld [vmem:[%s2329 + $0x4] sm:$0xf]
      %v2418 = vld [vmem:[%s2329 + $0x8] sm:$0xf]
      %v2419 = vld [vmem:[%s2329 + $0xc] sm:$0xf]
      %v2420 = vld [vmem:[%s2329 + $0x10] sm:$0xf]
      %v2421 = vld [vmem:[%s2329 + $0x14] sm:$0xf]
      %v2422 = vld [vmem:[%s2329 + $0x18] sm:$0xf]
      %v2423 = vld [vmem:[%s2329 + $0x1c] sm:$0xf]
      %v2424 = vld [vmem:[%s2329 + $0x20] sm:$0xf]
      %v2425 = vld [vmem:[%s1667] sm:$0xf]
      %v2426 = vld [vmem:[%s1667 + $0x4] sm:$0x3]
      %v2435 = vunpack.c.l.b16 %v2417
      %v2436 = vunpack.c.l.b16 %v2418
      %v2437 = vunpack.c.l.b16 %v2419
      %v2438 = vunpack.c.l.b16 %v2420
      %v2439 = vunpack.c.l.b16 %v2421
      %v2440 = vunpack.c.l.b16 %v2422
      %v2441 = vunpack.c.l.b16 %v2423
      %v2442 = vunpack.c.l.b16 %v2424
      %v2443 = vpack.c.b16 %v2436, %v2435
      %v2444 = vpack.c.b16 %v2438, %v2437
      %v2445 = vpack.c.b16 %v2440, %v2439
      %v2446 = vpack.c.b16 %v2442, %v2441
      %v2449 = vunpack.c.l.b16 %v2425
      %v2450 = vunpack.c.l.b16 %v2426
      %v2451 = vpack.c.b16 %v2450, %v2449
      %v2453 = vsel %vm1117, %v2443, 0
      %v2456 = vsel %vm1117, %v2444, 0
      %v2459 = vsel %vm1117, %v2445, 0
      %v2462 = vsel %vm1117, %v2446, 0
      %v2465 = vsel %vm1130, %v2451, 0
      %2467 = vmatpush.bf16.msra.mxu0 0
      %2468 = vmatpush.bf16.msra.mxu0 0
      %2469 = vmatpush.bf16.msra.mxu0 0
      %2470 = vmatpush.bf16.msra.mxu0 0
      %2471 = vmatpush.bf16.msra.mxu0 0
      %2472 = vmatpush.bf16.msra.mxu0 0
      %2473 = vmatpush.bf16.msra.mxu0 0
      %2474 = vmatpush.bf16.msra.mxu0 %v2465
      %2475 = vmatmul.bf16.gmra.mxu0 %v2453
      %v2476 = vpop.f32.mrf.mxu0
      %v2477 = vadd.f32 0.0, %v2476
      %v2478 = vpop.f32.mrf.mxu0
      %v2479 = vadd.f32 0.0, %v2478
      %2480 = vmatmul.bf16.gmra.mxu0 %v2456
      %v2481 = vpop.f32.mrf.mxu0
      %v2482 = vadd.f32 0.0, %v2481
      %v2483 = vpop.f32.mrf.mxu0
      %v2484 = vadd.f32 0.0, %v2483
      %2485 = vmatmul.bf16.gmra.mxu0 %v2459
      %v2486 = vpop.f32.mrf.mxu0
      %v2487 = vadd.f32 0.0, %v2486
      %v2488 = vpop.f32.mrf.mxu0
      %v2489 = vadd.f32 0.0, %v2488
      %2490 = vmatmul.bf16.gmra.mxu0 %v2462
      %v2491 = vpop.f32.mrf.mxu0
      %v2492 = vadd.f32 0.0, %v2491
      %v2493 = vpop.f32.mrf.mxu0
      %v2494 = vadd.f32 0.0, %v2493
      %2495 = vdwg.mxu0
      %v2496 = vadd.f32 %v2409, %v2477
      %v2497 = vadd.f32 %v2410, %v2479
      %v2498 = vadd.f32 %v2411, %v2482
      %v2499 = vadd.f32 %v2412, %v2484
      %v2500 = vadd.f32 %v2413, %v2487
      %v2501 = vadd.f32 %v2414, %v2489
      %v2502 = vadd.f32 %v2415, %v2492
      %v2503 = vadd.f32 %v2416, %v2494
      %v2504 = vld [vmem:[%s2329 + $0x8] sm:$0xf]
      %v2505 = vld [vmem:[%s2329 + $0xc] sm:$0xf]
      %v2506 = vld [vmem:[%s2329 + $0x10] sm:$0xf]
      %v2507 = vld [vmem:[%s2329 + $0x14] sm:$0xf]
      %v2508 = vld [vmem:[%s2329 + $0x18] sm:$0xf]
      %v2509 = vld [vmem:[%s2329 + $0x1c] sm:$0xf]
      %v2510 = vld [vmem:[%s2329 + $0x20] sm:$0xf]
      %v2511 = vld [vmem:[%s2329 + $0x24] sm:$0xf]
      %v2512 = vld [vmem:[%s1755] sm:$0xf]
      %v2513 = vld [vmem:[%s1755 + $0x4] sm:$0x3]
      %v2522 = vunpack.c.l.b16 %v2504
      %v2523 = vunpack.c.l.b16 %v2505
      %v2524 = vunpack.c.l.b16 %v2506
      %v2525 = vunpack.c.l.b16 %v2507
      %v2526 = vunpack.c.l.b16 %v2508
      %v2527 = vunpack.c.l.b16 %v2509
      %v2528 = vunpack.c.l.b16 %v2510
      %v2529 = vunpack.c.l.b16 %v2511
      %v2530 = vpack.c.b16 %v2523, %v2522
      %v2531 = vpack.c.b16 %v2525, %v2524
      %v2532 = vpack.c.b16 %v2527, %v2526
      %v2533 = vpack.c.b16 %v2529, %v2528
      %v2536 = vunpack.c.l.b16 %v2512
      %v2537 = vunpack.c.l.b16 %v2513
      %v2538 = vpack.c.b16 %v2537, %v2536
      %v2540 = vsel %vm1117, %v2530, 0
      %v2543 = vsel %vm1117, %v2531, 0
      %v2546 = vsel %vm1117, %v2532, 0
      %v2549 = vsel %vm1117, %v2533, 0
      %v2552 = vsel %vm1130, %v2538, 0
      %2554 = vmatpush.bf16.msra.mxu0 0
      %2555 = vmatpush.bf16.msra.mxu0 0
      %2556 = vmatpush.bf16.msra.mxu0 0
      %2557 = vmatpush.bf16.msra.mxu0 0
      %2558 = vmatpush.bf16.msra.mxu0 0
      %2559 = vmatpush.bf16.msra.mxu0 0
      %2560 = vmatpush.bf16.msra.mxu0 0
      %2561 = vmatpush.bf16.msra.mxu0 %v2552
      %2562 = vmatmul.bf16.gmra.mxu0 %v2540
      %v2563 = vpop.f32.mrf.mxu0
      %v2564 = vadd.f32 0.0, %v2563
      %v2565 = vpop.f32.mrf.mxu0
      %v2566 = vadd.f32 0.0, %v2565
      %2567 = vmatmul.bf16.gmra.mxu0 %v2543
      %v2568 = vpop.f32.mrf.mxu0
      %v2569 = vadd.f32 0.0, %v2568
      %v2570 = vpop.f32.mrf.mxu0
      %v2571 = vadd.f32 0.0, %v2570
      %2572 = vmatmul.bf16.gmra.mxu0 %v2546
      %v2573 = vpop.f32.mrf.mxu0
      %v2574 = vadd.f32 0.0, %v2573
      %v2575 = vpop.f32.mrf.mxu0
      %v2576 = vadd.f32 0.0, %v2575
      %2577 = vmatmul.bf16.gmra.mxu0 %v2549
      %v2578 = vpop.f32.mrf.mxu0
      %v2579 = vadd.f32 0.0, %v2578
      %v2580 = vpop.f32.mrf.mxu0
      %v2581 = vadd.f32 0.0, %v2580
      %2582 = vdwg.mxu0
      %v2583 = vadd.f32 %v2496, %v2564
      %v2584 = vadd.f32 %v2497, %v2566
      %v2585 = vadd.f32 %v2498, %v2569
      %v2586 = vadd.f32 %v2499, %v2571
      %v2587 = vadd.f32 %v2500, %v2574
      %v2588 = vadd.f32 %v2501, %v2576
      %v2589 = vadd.f32 %v2502, %v2579
      %v2590 = vadd.f32 %v2503, %v2581
      %s2591 = scalar_lea.vmem %s291, 448
      %2592 = vst [vmem:[%s2591] sm:$0xff] %v2583
      %2593 = vst [vmem:[%s2591 + $0x8] sm:$0xff] %v2584
      %2594 = vst [vmem:[%s2591 + $0x10] sm:$0xff] %v2585
      %2595 = vst [vmem:[%s2591 + $0x18] sm:$0xff] %v2586
      %2596 = vst [vmem:[%s2591 + $0x20] sm:$0xff] %v2587
      %2597 = vst [vmem:[%s2591 + $0x28] sm:$0xff] %v2588
      %2598 = vst [vmem:[%s2591 + $0x30] sm:$0xff] %v2589
      %2599 = vst [vmem:[%s2591 + $0x38] sm:$0xff] %v2590
      %s2600 = smul.u32 8, %s19
      %p2601 = scmp.lt.s32.totalorder %s18, 1
      %s2602 = scalar_select %p2601, %s18, 1
      %p2603 = scmp.lt.s32.totalorder %s2600, 7
      %s2604 = scalar_select %p2603, %s2600, 7
      %s2605 = smul.addr %s2604, 8
      %s2606 = smul.addr %s2602, 64
      %s2607 = sadd.s32 %s2605, %s2606
      %s2608 = smul.addr %s2607, 8
      %s2609 = scalar_lea.vmem %s3, %s2608
      // Predicated region
      $region40: #{cdc_t_forward.1} parent=31 // pred_check
        %p2610 = pneg %p127
      $region41: #{cdc_t_forward.1} parent=31 // pred_check_branch
        %2612 = sbr.rel (%p2610) target = $region43
      $region42: #{cdc_t_forward.1} parent=31 // pred_region
        %s2613 = smul.u32 8, %s19
      $region43: #{cdc_t_forward.1} parent=31 // pred_fallthru
        _
    $region32: #{cdc_t_forward.1} parent=5 // pred_fallthru
      _
    %p2614 = scmp.le.s32.totalorder 2, %s9
    // Predicated region
    $region44: #{cdc_t_forward.1} parent=5 // pred_check
      %p2615 = pneg %p2614
    $region45: #{cdc_t_forward.1} parent=5 // pred_check_branch
      %2617 = sbr.rel (%p2615) target = $region47
    $region46: #{cdc_t_forward.1} parent=5 // pred_region
      %s2618 = ssub.s32 %s9, 2
      // Predicated region
      $region48: #{cdc_t_forward.1} parent=46 // pred_check
        %p2619 = pneg %p133
      $region49: #{cdc_t_forward.1} parent=46 // pred_check_branch
        %2621 = sbr.rel (%p2619) target = $region51
      $region50: #{cdc_t_forward.1} parent=46 // pred_region
        %s2622 = smul.u32 8, %s21
        %p2623 = scmp.lt.s32.totalorder %s20, 1
        %s2624 = scalar_select %p2623, %s20, 1
        %p2625 = scmp.lt.s32.totalorder %s2622, 7
        %s2626 = scalar_select %p2625, %s2622, 7
        %s2627 = smul.addr %s2626, 8
        %s2628 = smul.addr %s2624, 64
        %s2629 = sadd.s32 %s2627, %s2628
        %s2630 = smul.addr %s2629, 8
        %s2631 = scalar_lea.vmem %s3, %s2630
      $region51: #{cdc_t_forward.1} parent=46 // pred_fallthru
        _
    $region47: #{cdc_t_forward.1} parent=5 // pred_fallthru
      _
  $region6: #{cdc_t_forward.1} parent=0 // loop_footer
    %s13 = sadd.s32 1, %s9
  $region7: #{cdc_t_forward.1} parent=0 // loop_footer_branch
    %8 = sbr.rel target = $region3
  $region8: #{cdc_t_forward.1} parent=0 // loop_exit
    _

</llo_original>
